<compile_context>
chip_gen: v7x
topology: tpu7x:2x2x1
jax: 0.10.0
libtpu: 0.0.40
codegen_flags: <defaults>
</compile_context>

<pallas_src>
import functools
import math

import jax
import jax.numpy as jnp
from jax import lax
from jax.experimental import pallas as pl
from jax.experimental.pallas import tpu as pltpu

NUM_LAYERS = 3
NUM_FILTERS = 512
HALF = NUM_FILTERS // 2          # 256
KSIZE = 5
PAD = 2
IN_SIZE = 74
NUM_CLASSES = 2
BN_EPS = 1e-5
DROP_P = 0.1


def _round_up(n, m):
    return ((n + m - 1) // m) * m


def _pick_batch_block(batch, t_pad, target_rows=512):
    """Largest divisor bb of `batch` with bb * t_pad <= target_rows rows per block,
    preferring >= 2 grid steps (megacore / pipelining) when batch allows it."""
    best = 1
    for bb in range(1, batch + 1):
        if batch % bb:
            continue
        if bb * t_pad > target_rows:
            break
        if batch // bb >= 2 or batch == 1:
            best = bb
    return best


# ---------------------------------------------------------------------------
# Kernel 1: fused Conv1d(k=5, pad=2) + bias + BatchNorm(eval) + gated activation
#           + (optional) fused dropout+skip output + per-batch time sum.
# ---------------------------------------------------------------------------
def _conv_bn_glu_kernel(*refs, ksize, pad, t_out, t_pad, bb, has_skip):
    """Flat layout: each batch element owns a t_pad-row segment of the
    (bb * t_pad, C) block; rows [pad, pad + t_out) of a segment hold data, the
    rest are zeros.  The 5 conv taps become 5 shifted MXU matmuls over the whole
    flattened block (M = bb * t_pad), accumulated into an f32 VMEM scratch."""
    if has_skip:
        (x_ref, w_ref, scale_ref, shift_ref, mult_ref,
         cur_ref, tsum_ref, acc_ref) = refs
    else:
        (x_ref, w_ref, scale_ref, shift_ref, tsum_ref, acc_ref) = refs
        mult_ref = cur_ref = None

    rows = bb * t_pad
    c_out = w_ref.shape[2]
    c_half = c_out // 2

    # --- conv as 5 shifted matmuls, f32 accumulation in VMEM scratch.
    # Tap 0 covers all rows and doubles as the accumulator init (overwrites any
    # stale scratch contents).  Later taps cover rows - k rows; the (<=4) tail
    # rows of the block never correspond to valid conv outputs and get masked.
    acc_ref[...] = jnp.dot(x_ref[...], w_ref[0],
                           preferred_element_type=jnp.float32)
    for k in range(1, ksize):
        nv = rows - k
        acc_ref[pl.ds(0, nv), :] += jnp.dot(x_ref[pl.ds(k, nv), :], w_ref[k],
                                            preferred_element_type=jnp.float32)

    # --- folded conv-bias + BatchNorm(eval) + gated tanh * sigmoid (f32 epilogue).
    y = acc_ref[...] * scale_ref[...] + shift_ref[...]           # (rows, c_out)
    gate_t = jnp.tanh(y[:, :c_half])
    gate_s = 1.0 / (1.0 + jnp.exp(-y[:, c_half:]))
    tmp = gate_t * gate_s                                        # (rows, c_half)

    # Mask rows whose segment-local index is not a real conv output (t >= t_out).
    tp = lax.broadcasted_iota(jnp.int32, (rows, 1), 0) % t_pad
    tmp = jnp.where(tp < t_out, tmp, 0.0)

    # --- per-batch-element time sum for the head (XLU reduce, MXU stays busy).
    tsum_ref[...] = jnp.sum(tmp.reshape(bb, t_pad, c_half), axis=1,
                            keepdims=True)

    if has_skip:
        # --- fused dropout + residual: cur = dropout(tmp) + tmp, written shifted
        # by `pad` rows so it is already in padded layout for the next layer.
        curv = tmp * mult_ref[...] + tmp                         # (rows, c_half)
        cur_ref[...] = jnp.zeros_like(cur_ref)
        cur_ref[pl.ds(pad, rows - pad), :] = curv[: rows - pad, :].astype(
            cur_ref.dtype)


def conv_bn_glu(x_flat, w, scale, shift, mult, *, t_out, t_pad, bb, has_skip,
                out_dtype):
    """x_flat: (B * t_pad, C_in) flat padded input (zeros at pad rows)."""
    rows_total, c_in = x_flat.shape
    batch = rows_total // t_pad
    ksize, _, c_out = w.shape
    c_half = c_out // 2
    rows = bb * t_pad

    in_specs = [
        pl.BlockSpec((rows, c_in), lambda i: (i, 0)),
        pl.BlockSpec((ksize, c_in, c_out), lambda i: (0, 0, 0)),
        pl.BlockSpec((1, c_out), lambda i: (0, 0)),
        pl.BlockSpec((1, c_out), lambda i: (0, 0)),
    ]
    inputs = [x_flat, w, scale, shift]
    out_shape = []
    out_specs = []
    if has_skip:
        in_specs.append(pl.BlockSpec((rows, c_half), lambda i: (i, 0)))
        inputs.append(mult)
        out_shape.append(jax.ShapeDtypeStruct((rows_total, c_half), out_dtype))
        out_specs.append(pl.BlockSpec((rows, c_half), lambda i: (i, 0)))
    out_shape.append(jax.ShapeDtypeStruct((batch, 1, c_half), jnp.float32))
    out_specs.append(pl.BlockSpec((bb, 1, c_half), lambda i: (i, 0, 0)))

    kernel = functools.partial(
        _conv_bn_glu_kernel, ksize=ksize, pad=PAD, t_out=t_out, t_pad=t_pad,
        bb=bb, has_skip=has_skip)

    outs = pl.pallas_call(
        kernel,
        out_shape=tuple(out_shape),
        grid=(batch // bb,),
        in_specs=in_specs,
        out_specs=tuple(out_specs),
        scratch_shapes=[pltpu.VMEM((rows, c_out), jnp.float32)],
        compiler_params=pltpu.CompilerParams(
            dimension_semantics=("parallel",),
            # raised from v5e's 16 MiB default; blocks here are far smaller.
            vmem_limit_bytes=32 * 1024 * 1024),
    )(*inputs)

    if has_skip:
        cur, tsum = outs
    else:
        (tsum,) = outs
        cur = None
    return cur, tsum


# ---------------------------------------------------------------------------
# Kernel 2: head — combine per-layer time-sums (s0 + s1 + 2*s2), /4096,
#           Linear(256 -> 2) and softmax, fused.  Tiny: (B,256)x3 -> (B,2).
# ---------------------------------------------------------------------------
def _head_kernel(s0_ref, s1_ref, s2_ref, wl_ref, bl_ref, o_ref):
    pre = (s0_ref[...] + s1_ref[...] + 2.0 * s2_ref[...]) * (1.0 / 4096.0)
    logits = jnp.dot(pre, wl_ref[...],
                     preferred_element_type=jnp.float32) + bl_ref[...]
    m = jnp.max(logits, axis=1, keepdims=True)
    e = jnp.exp(logits - m)
    o_ref[...] = (e / jnp.sum(e, axis=1, keepdims=True)).astype(o_ref.dtype)


def head(s0, s1, s2, wl, bl):
    batch, c_half = s0.shape
    return pl.pallas_call(
        _head_kernel,
        out_shape=jax.ShapeDtypeStruct((batch, NUM_CLASSES), jnp.float32),
        grid=(1,),
        in_specs=[
            pl.BlockSpec((batch, c_half), lambda i: (0, 0)),
            pl.BlockSpec((batch, c_half), lambda i: (0, 0)),
            pl.BlockSpec((batch, c_half), lambda i: (0, 0)),
            pl.BlockSpec((c_half, NUM_CLASSES), lambda i: (0, 0)),
            pl.BlockSpec((1, NUM_CLASSES), lambda i: (0, 0)),
        ],
        out_specs=pl.BlockSpec((batch, NUM_CLASSES), lambda i: (0, 0)),
        compiler_params=pltpu.CompilerParams(
            dimension_semantics=("arbitrary",)),
    )(s0, s1, s2, wl, bl)


# ---------------------------------------------------------------------------
# Full forward pass (matches ResNet.forward in the torch module).
# ---------------------------------------------------------------------------
def resnet_forward(x, params, *, drop_p=DROP_P, dropout_key=None,
                   compute_dtype=jnp.float32, batch_block=None):
    """x: (B, 74, T) channel-first, like the torch module.

    Returns (softmax probs (B, 2), per-layer time-sums ((B, 256),) * 3).
    """
    batch, c0, seq = x.shape
    assert c0 == IN_SIZE
    t_pad = _round_up(seq + 2 * PAD, 8)
    bb = batch_block or _pick_batch_block(batch, t_pad)
    assert batch % bb == 0

    # Layer-0 input: channel-last with the SAME-conv zero time-padding baked into
    # a flat (B * t_pad, 74) slab — no per-layer host-side jnp.pad ever again.
    x_cl = jnp.transpose(x, (0, 2, 1)).astype(compute_dtype)
    cur = jnp.zeros((batch, t_pad, c0), compute_dtype)
    cur = cur.at[:, PAD:PAD + seq, :].set(x_cl).reshape(batch * t_pad, c0)

    if dropout_key is None:
        dropout_key = jax.random.PRNGKey(0)

    tsums = []
    for i in range(NUM_LAYERS):
        w, scale, shift = params["conv"][i]
        has_skip = i < NUM_LAYERS - 1          # last layer: dropout off, no skip out
        mult = None
        if has_skip:
            if drop_p > 0.0:
                dropout_key, sub = jax.random.split(dropout_key)
                keep = jax.random.bernoulli(sub, 1.0 - drop_p,
                                            (batch * t_pad, HALF))
                mult = keep.astype(jnp.float32) * (1.0 / (1.0 - drop_p))
            else:
                mult = jnp.ones((batch * t_pad, HALF), jnp.float32)
        nxt, tsum = conv_bn_glu(cur, w.astype(compute_dtype), scale, shift,
                                mult, t_out=seq, t_pad=t_pad, bb=bb,
                                has_skip=has_skip, out_dtype=compute_dtype)
        tsums.append(tsum.reshape(batch, HALF))
        if has_skip:
            cur = nxt

    wl, bl = params["linear"]
    probs = head(tsums[0], tsums[1], tsums[2], wl, bl)
    return probs, tuple(tsums)


# ---------------------------------------------------------------------------
# Parameters (xavier-normal init like the torch module, BN folded for eval).
# ---------------------------------------------------------------------------
def init_params(key):
    conv_params = []
    c_in = IN_SIZE
    for _ in range(NUM_LAYERS):
        key, kw, kb, kg, kbeta, km, kv = jax.random.split(key, 7)
        fan_in, fan_out = c_in * KSIZE, NUM_FILTERS * KSIZE
        gain = 5.0 / 3.0                                  # calculate_gain('tanh')
        std = gain * math.sqrt(2.0 / (fan_in + fan_out))
        w = jax.random.normal(kw, (KSIZE, c_in, NUM_FILTERS), jnp.float32) * std
        conv_bias = 0.05 * jax.random.normal(kb, (NUM_FILTERS,), jnp.float32)
        gamma = 1.0 + 0.1 * jax.random.normal(kg, (NUM_FILTERS,), jnp.float32)
        beta = 0.1 * jax.random.normal(kbeta, (NUM_FILTERS,), jnp.float32)
        run_mean = 0.1 * jax.random.normal(km, (NUM_FILTERS,), jnp.float32)
        run_var = 1.0 + 0.1 * jnp.abs(
            jax.random.normal(kv, (NUM_FILTERS,), jnp.float32))
        scale = gamma / jnp.sqrt(run_var + BN_EPS)
        shift = beta + (conv_bias - run_mean) * scale
        conv_params.append((w, scale.reshape(1, NUM_FILTERS),
                            shift.reshape(1, NUM_FILTERS)))
        c_in = HALF
    key, kwl, kbl = jax.random.split(key, 3)
    std_l = math.sqrt(2.0 / (HALF + NUM_CLASSES))         # xavier, gain 1
    wl = jax.random.normal(kwl, (HALF, NUM_CLASSES), jnp.float32) * std_l
    bl = 0.05 * jax.random.normal(kbl, (1, NUM_CLASSES), jnp.float32)
    return {"conv": conv_params, "linear": (wl, bl)}


def reference_forward_nodrop(x, params):
    """Pure-jnp reference with dropout as identity (p=0), for checking."""
    _, _, seq = x.shape
    cur = jnp.transpose(x, (0, 2, 1)).astype(jnp.float32)
    res = None
    tsums = []
    tmp = None
    for i in range(NUM_LAYERS):
        w, scale, shift = params["conv"][i]
        xp = jnp.pad(cur, ((0, 0), (PAD, PAD), (0, 0)))
        y = sum(jnp.einsum("btc,cd->btd", xp[:, k:k + seq, :], w[k],
                           precision=jax.lax.Precision.HIGHEST)
                for k in range(KSIZE))
        y = y * scale[None, :, :] + shift[None, :, :]
        tmp = jnp.tanh(y[..., :HALF]) * jax.nn.sigmoid(y[..., HALF:])
        tsums.append(jnp.sum(tmp, axis=1))
        res = tmp if res is None else res + tmp
        if i < NUM_LAYERS - 1:
            cur = tmp + tmp                    # dropout == identity, then + skip(=tmp)
    xf = tmp + res
    pre = jnp.sum(xf, axis=1) / 4096.0
    wl, bl = params["linear"]
    logits = pre @ wl + bl
    return jax.nn.softmax(logits, axis=1), tsums


if __name__ == "__main__":
    root = jax.random.PRNGKey(0)
    k_x, k_p = jax.random.split(root)
    batch, seq = 2, 16
    x = jax.random.normal(k_x, (batch, IN_SIZE, seq), dtype=jnp.float32)
    params = init_params(k_p)

    # 1) f32, dropout disabled -> must match pure-jnp reference.
    probs_f32, tsums_f32 = resnet_forward(x, params, drop_p=0.0,
                                          compute_dtype=jnp.float32)
    probs_f32 = jax.block_until_ready(probs_f32)
    ref_probs, ref_tsums = reference_forward_nodrop(x, params)
    assert probs_f32.shape == (batch, NUM_CLASSES)
    for got, want in zip(tsums_f32, ref_tsums):
        assert bool(jnp.allclose(got, want, atol=5e-2, rtol=0.0))
    assert bool(jnp.allclose(probs_f32, ref_probs, atol=2e-3, rtol=0.0))

    # 2) bf16 fast path (bf16 weights/activations, f32 MXU accumulation).
    probs_bf16, _ = resnet_forward(x, params, drop_p=0.0,
                                   compute_dtype=jnp.bfloat16)
    probs_bf16 = jax.block_until_ready(probs_bf16)
    assert bool(jnp.allclose(probs_bf16, ref_probs, atol=1e-2, rtol=0.0))

    # 3) Module semantics: dropout p=0.1 (train=True) on the first two layers.
    probs, _ = resnet_forward(x, params, drop_p=DROP_P,
                              dropout_key=jax.random.PRNGKey(42),
                              compute_dtype=jnp.bfloat16)
    probs = jax.block_until_ready(probs)
    assert probs.shape == (batch, NUM_CLASSES)
    assert bool(jnp.all(jnp.isfinite(probs)))
    assert bool(jnp.allclose(jnp.sum(probs, axis=1), 1.0, atol=1e-5))

    print("KERNEL_OK")
</pallas_src>

<mosaic_0001>
module attributes {stable_mosaic.version = 11 : i64} {
  func.func @_conv_bn_glu_kernel(%arg0: i32, %arg1: memref<24x74xf32, #tpu.memory_space<vmem>>, %arg2: memref<5x74x512xf32, #tpu.memory_space<vmem>>, %arg3: memref<1x512xf32, #tpu.memory_space<vmem>>, %arg4: memref<1x512xf32, #tpu.memory_space<vmem>>, %arg5: memref<24x256xf32, #tpu.memory_space<vmem>>, %arg6: memref<24x256xf32, #tpu.memory_space<vmem>>, %arg7: memref<1x1x256xf32, #tpu.memory_space<vmem>>, %arg8: memref<24x512xf32, #tpu.memory_space<vmem>>) attributes {dimension_semantics = [#tpu.dimension_semantics<parallel>], iteration_bounds = array<i64: 2>, scalar_prefetch = 0 : i64, scratch_operands = 1 : i64, tpu.core_type = #tpu.core_type<tc>, window_params = [{transform_indices = @transform_0, window_bounds = array<i64: 24, 74>}, {pipeline_mode = #tpu.pipeline_mode<synchronous>, transform_indices = @transform_1, window_bounds = array<i64: 5, 74, 512>}, {pipeline_mode = #tpu.pipeline_mode<synchronous>, transform_indices = @transform_2, window_bounds = array<i64: 1, 512>}, {pipeline_mode = #tpu.pipeline_mode<synchronous>, transform_indices = @transform_3, window_bounds = array<i64: 1, 512>}, {transform_indices = @transform_4, window_bounds = array<i64: 24, 256>}, {transform_indices = @transform_5, window_bounds = array<i64: 24, 256>}, {transform_indices = @transform_6, window_bounds = array<i64: 1, 1, 256>}]} {
    %c0 = arith.constant 0 : index
    %c0_0 = arith.constant 0 : index
    %0 = vector.load %arg1[%c0, %c0_0] : memref<24x74xf32, #tpu.memory_space<vmem>>, vector<24x74xf32>
    %c0_1 = arith.constant 0 : index
    %c0_2 = arith.constant 0 : index
    %c0_3 = arith.constant 0 : index
    %1 = vector.load %arg2[%c0_1, %c0_2, %c0_3] : memref<5x74x512xf32, #tpu.memory_space<vmem>>, vector<1x74x512xf32>
    %2 = vector.shape_cast %1 : vector<1x74x512xf32> to vector<74x512xf32>
    %cst = arith.constant dense<0.000000e+00> : vector<24x512xf32>
    %3 = tpu.matmul %0, %2, %cst {dimension_numbers = #tpu.dot_dimension_numbers<[1], [0], [0], [1], [0, 0, 1, 1], [], []>} : vector<24x74xf32>, vector<74x512xf32>, vector<24x512xf32> -> vector<24x512xf32>
    %c0_4 = arith.constant 0 : index
    %c0_5 = arith.constant 0 : index
    %4 = vector.load %arg8[%c0_4, %c0_5] : memref<24x512xf32, #tpu.memory_space<vmem>>, vector<24x512xf32>
    tpu.vector_store %arg8[%c0_4, %c0_5], %3 {strides = array<i32>} : memref<24x512xf32, #tpu.memory_space<vmem>>, vector<24x512xf32>,
    %c0_6 = arith.constant 0 : index
    %c0_7 = arith.constant 0 : index
    %5 = vector.load %arg8[%c0_6, %c0_7] : memref<24x512xf32, #tpu.memory_space<vmem>>, vector<23x512xf32>
    %c1 = arith.constant 1 : index
    %c0_8 = arith.constant 0 : index
    %6 = vector.load %arg1[%c1, %c0_8] : memref<24x74xf32, #tpu.memory_space<vmem>>, vector<23x74xf32>
    %c1_9 = arith.constant 1 : index
    %c0_10 = arith.constant 0 : index
    %c0_11 = arith.constant 0 : index
    %7 = vector.load %arg2[%c1_9, %c0_10, %c0_11] : memref<5x74x512xf32, #tpu.memory_space<vmem>>, vector<1x74x512xf32>
    %8 = vector.shape_cast %7 : vector<1x74x512xf32> to vector<74x512xf32>
    %cst_12 = arith.constant dense<0.000000e+00> : vector<23x512xf32>
    %9 = tpu.matmul %6, %8, %cst_12 {dimension_numbers = #tpu.dot_dimension_numbers<[1], [0], [0], [1], [0, 0, 1, 1], [], []>} : vector<23x74xf32>, vector<74x512xf32>, vector<23x512xf32> -> vector<23x512xf32>
    %10 = arith.addf %5, %9 : vector<23x512xf32>
    %c0_13 = arith.constant 0 : index
    %c0_14 = arith.constant 0 : index
    %11 = vector.load %arg8[%c0_13, %c0_14] : memref<24x512xf32, #tpu.memory_space<vmem>>, vector<23x512xf32>
    tpu.vector_store %arg8[%c0_13, %c0_14], %10 {strides = array<i32>} : memref<24x512xf32, #tpu.memory_space<vmem>>, vector<23x512xf32>,
    %c0_15 = arith.constant 0 : index
    %c0_16 = arith.constant 0 : index
    %12 = vector.load %arg8[%c0_15, %c0_16] : memref<24x512xf32, #tpu.memory_space<vmem>>, vector<22x512xf32>
    %c2 = arith.constant 2 : index
    %c0_17 = arith.constant 0 : index
    %13 = vector.load %arg1[%c2, %c0_17] : memref<24x74xf32, #tpu.memory_space<vmem>>, vector<22x74xf32>
    %c2_18 = arith.constant 2 : index
    %c0_19 = arith.constant 0 : index
    %c0_20 = arith.constant 0 : index
    %14 = vector.load %arg2[%c2_18, %c0_19, %c0_20] : memref<5x74x512xf32, #tpu.memory_space<vmem>>, vector<1x74x512xf32>
    %15 = vector.shape_cast %14 : vector<1x74x512xf32> to vector<74x512xf32>
    %cst_21 = arith.constant dense<0.000000e+00> : vector<22x512xf32>
    %16 = tpu.matmul %13, %15, %cst_21 {dimension_numbers = #tpu.dot_dimension_numbers<[1], [0], [0], [1], [0, 0, 1, 1], [], []>} : vector<22x74xf32>, vector<74x512xf32>, vector<22x512xf32> -> vector<22x512xf32>
    %17 = arith.addf %12, %16 : vector<22x512xf32>
    %c0_22 = arith.constant 0 : index
    %c0_23 = arith.constant 0 : index
    %18 = vector.load %arg8[%c0_22, %c0_23] : memref<24x512xf32, #tpu.memory_space<vmem>>, vector<22x512xf32>
    tpu.vector_store %arg8[%c0_22, %c0_23], %17 {strides = array<i32>} : memref<24x512xf32, #tpu.memory_space<vmem>>, vector<22x512xf32>,
    %c0_24 = arith.constant 0 : index
    %c0_25 = arith.constant 0 : index
    %19 = vector.load %arg8[%c0_24, %c0_25] : memref<24x512xf32, #tpu.memory_space<vmem>>, vector<21x512xf32>
    %c3 = arith.constant 3 : index
    %c0_26 = arith.constant 0 : index
    %20 = vector.load %arg1[%c3, %c0_26] : memref<24x74xf32, #tpu.memory_space<vmem>>, vector<21x74xf32>
    %c3_27 = arith.constant 3 : index
    %c0_28 = arith.constant 0 : index
    %c0_29 = arith.constant 0 : index
    %21 = vector.load %arg2[%c3_27, %c0_28, %c0_29] : memref<5x74x512xf32, #tpu.memory_space<vmem>>, vector<1x74x512xf32>
    %22 = vector.shape_cast %21 : vector<1x74x512xf32> to vector<74x512xf32>
    %cst_30 = arith.constant dense<0.000000e+00> : vector<21x512xf32>
    %23 = tpu.matmul %20, %22, %cst_30 {dimension_numbers = #tpu.dot_dimension_numbers<[1], [0], [0], [1], [0, 0, 1, 1], [], []>} : vector<21x74xf32>, vector<74x512xf32>, vector<21x512xf32> -> vector<21x512xf32>
    %24 = arith.addf %19, %23 : vector<21x512xf32>
    %c0_31 = arith.constant 0 : index
    %c0_32 = arith.constant 0 : index
    %25 = vector.load %arg8[%c0_31, %c0_32] : memref<24x512xf32, #tpu.memory_space<vmem>>, vector<21x512xf32>
    tpu.vector_store %arg8[%c0_31, %c0_32], %24 {strides = array<i32>} : memref<24x512xf32, #tpu.memory_space<vmem>>, vector<21x512xf32>,
    %c0_33 = arith.constant 0 : index
    %c0_34 = arith.constant 0 : index
    %26 = vector.load %arg8[%c0_33, %c0_34] : memref<24x512xf32, #tpu.memory_space<vmem>>, vector<20x512xf32>
    %c4 = arith.constant 4 : index
    %c0_35 = arith.constant 0 : index
    %27 = vector.load %arg1[%c4, %c0_35] : memref<24x74xf32, #tpu.memory_space<vmem>>, vector<20x74xf32>
    %c4_36 = arith.constant 4 : index
    %c0_37 = arith.constant 0 : index
    %c0_38 = arith.constant 0 : index
    %28 = vector.load %arg2[%c4_36, %c0_37, %c0_38] : memref<5x74x512xf32, #tpu.memory_space<vmem>>, vector<1x74x512xf32>
    %29 = vector.shape_cast %28 : vector<1x74x512xf32> to vector<74x512xf32>
    %cst_39 = arith.constant dense<0.000000e+00> : vector<20x512xf32>
    %30 = tpu.matmul %27, %29, %cst_39 {dimension_numbers = #tpu.dot_dimension_numbers<[1], [0], [0], [1], [0, 0, 1, 1], [], []>} : vector<20x74xf32>, vector<74x512xf32>, vector<20x512xf32> -> vector<20x512xf32>
    %31 = arith.addf %26, %30 : vector<20x512xf32>
    %c0_40 = arith.constant 0 : index
    %c0_41 = arith.constant 0 : index
    %32 = vector.load %arg8[%c0_40, %c0_41] : memref<24x512xf32, #tpu.memory_space<vmem>>, vector<20x512xf32>
    tpu.vector_store %arg8[%c0_40, %c0_41], %31 {strides = array<i32>} : memref<24x512xf32, #tpu.memory_space<vmem>>, vector<20x512xf32>,
    %c0_42 = arith.constant 0 : index
    %c0_43 = arith.constant 0 : index
    %33 = vector.load %arg8[%c0_42, %c0_43] : memref<24x512xf32, #tpu.memory_space<vmem>>, vector<24x512xf32>
    %c0_44 = arith.constant 0 : index
    %c0_45 = arith.constant 0 : index
    %34 = vector.load %arg3[%c0_44, %c0_45] : memref<1x512xf32, #tpu.memory_space<vmem>>, vector<1x512xf32>
    %35 = vector.broadcast %34 : vector<1x512xf32> to vector<24x512xf32>
    %36 = arith.mulf %33, %35 : vector<24x512xf32>
    %c0_46 = arith.constant 0 : index
    %c0_47 = arith.constant 0 : index
    %37 = vector.load %arg4[%c0_46, %c0_47] : memref<1x512xf32, #tpu.memory_space<vmem>>, vector<1x512xf32>
    %38 = vector.broadcast %37 : vector<1x512xf32> to vector<24x512xf32>
    %39 = arith.addf %36, %38 : vector<24x512xf32>
    %40 = vector.extract_strided_slice %39 {offsets = [0, 0], sizes = [24, 256], strides = [1, 1]} : vector<24x512xf32> to vector<24x256xf32>
    %41 = math.tanh %40 : vector<24x256xf32>
    %42 = vector.extract_strided_slice %39 {offsets = [0, 256], sizes = [24, 256], strides = [1, 1]} : vector<24x512xf32> to vector<24x256xf32>
    %cst_48 = arith.constant 0.000000e+00 : f32
    %43 = vector.broadcast %cst_48 : f32 to vector<24x256xf32>
    %44 = arith.subf %43, %42 : vector<24x256xf32>
    %45 = math.exp %44 : vector<24x256xf32>
    %cst_49 = arith.constant 1.000000e+00 : f32
    %46 = vector.broadcast %cst_49 : f32 to vector<24x256xf32>
    %47 = arith.addf %46, %45 : vector<24x256xf32>
    %cst_50 = arith.constant 1.000000e+00 : f32
    %48 = vector.broadcast %cst_50 : f32 to vector<24x256xf32>
    %49 = arith.divf %48, %47 : vector<24x256xf32>
    %50 = arith.mulf %41, %49 : vector<24x256xf32>
    %51 = tpu.iota {dimensions = array<i32: 0>} : vector<24x1xi32>
    %c24_i32 = arith.constant 24 : i32
    %c0_i32 = arith.constant 0 : i32
    %52 = arith.cmpi eq, %c24_i32, %c0_i32 : i32
    %c1_i32 = arith.constant 1 : i32
    %53 = arith.select %52, %c1_i32, %c24_i32 : i32
    %54 = vector.broadcast %53 : i32 to vector<24x1xi32>
    %55 = arith.remsi %51, %54 : vector<24x1xi32>
    %c0_i32_51 = arith.constant 0 : i32
    %56 = vector.broadcast %c0_i32_51 : i32 to vector<24x1xi32>
    %57 = arith.cmpi ne, %55, %56 : vector<24x1xi32>
    %c0_i32_52 = arith.constant 0 : i32
    %58 = vector.broadcast %c0_i32_52 : i32 to vector<24x1xi32>
    %59 = arith.cmpi slt, %55, %58 : vector<24x1xi32>
    %c0_i32_53 = arith.constant 0 : i32
    %60 = arith.cmpi slt, %53, %c0_i32_53 : i32
    %61 = vector.broadcast %60 : i1 to vector<24x1xi1>
    %62 = vector.broadcast %61 : vector<24x1xi1> to vector<24x1xi1>
    %63 = arith.xori %59, %62 : vector<24x1xi1>
    %64 = arith.andi %63, %57 : vector<24x1xi1>
    %65 = vector.broadcast %53 : i32 to vector<24x1xi32>
    %66 = arith.addi %55, %65 : vector<24x1xi32>
    %67 = arith.select %64, %66, %55 : vector<24x1xi1>, vector<24x1xi32>
    %c16_i32 = arith.constant 16 : i32
    %68 = vector.broadcast %c16_i32 : i32 to vector<24x1xi32>
    %69 = arith.cmpi slt, %67, %68 : vector<24x1xi32>
    %cst_54 = arith.constant 0.000000e+00 : f32
    %70 = vector.shape_cast %69 : vector<24x1xi1> to vector<24x1xi1>
    %71 = vector.broadcast %70 : vector<24x1xi1> to vector<24x256xi1>
    %72 = vector.broadcast %cst_54 : f32 to vector<24x256xf32>
    %73 = arith.select %71, %50, %72 : vector<24x256xi1>, vector<24x256xf32>
    %74 = vector.shape_cast %73 : vector<24x256xf32> to vector<1x24x256xf32>
    %cst_55 = arith.constant dense<0.000000e+00> : vector<1x256xf32>
    %75 = vector.multi_reduction <add>, %74, %cst_55 [1] : vector<1x24x256xf32> to vector<1x256xf32>
    %76 = vector.shape_cast %75 : vector<1x256xf32> to vector<1x1x256xf32>
    %c0_56 = arith.constant 0 : index
    %c0_57 = arith.constant 0 : index
    %c0_58 = arith.constant 0 : index
    %77 = vector.load %arg7[%c0_56, %c0_57, %c0_58] : memref<1x1x256xf32, #tpu.memory_space<vmem>>, vector<1x1x256xf32>
    tpu.vector_store %arg7[%c0_56, %c0_57, %c0_58], %76 {strides = array<i32>} : memref<1x1x256xf32, #tpu.memory_space<vmem>>, vector<1x1x256xf32>,
    %c0_59 = arith.constant 0 : index
    %c0_60 = arith.constant 0 : index
    %78 = vector.load %arg5[%c0_59, %c0_60] : memref<24x256xf32, #tpu.memory_space<vmem>>, vector<24x256xf32>
    %79 = arith.mulf %73, %78 : vector<24x256xf32>
    %80 = arith.addf %79, %73 : vector<24x256xf32>
    %cst_61 = arith.constant 0.000000e+00 : f32
    %81 = vector.broadcast %cst_61 : f32 to vector<24x256xf32>
    %c0_62 = arith.constant 0 : index
    %c0_63 = arith.constant 0 : index
    %82 = vector.load %arg6[%c0_62, %c0_63] : memref<24x256xf32, #tpu.memory_space<vmem>>, vector<24x256xf32>
    tpu.vector_store %arg6[%c0_62, %c0_63], %81 {strides = array<i32>} : memref<24x256xf32, #tpu.memory_space<vmem>>, vector<24x256xf32>,
    %83 = vector.extract_strided_slice %80 {offsets = [0, 0], sizes = [22, 256], strides = [1, 1]} : vector<24x256xf32> to vector<22x256xf32>
    %c2_64 = arith.constant 2 : index
    %c0_65 = arith.constant 0 : index
    %84 = vector.load %arg6[%c2_64, %c0_65] : memref<24x256xf32, #tpu.memory_space<vmem>>, vector<22x256xf32>
    tpu.vector_store %arg6[%c2_64, %c0_65], %83 {strides = array<i32>} : memref<24x256xf32, #tpu.memory_space<vmem>>, vector<22x256xf32>,
    return
  }
  func.func @transform_0(%arg0: i32) -> (i32, i32) {
    %c0_i32 = arith.constant 0 : i32
    %c0_i32_0 = arith.constant 0 : i32
    return %arg0, %c0_i32 : i32, i32
  }
  func.func @transform_1(%arg0: i32) -> (i32, i32, i32) {
    %c0_i32 = arith.constant 0 : i32
    %c0_i32_0 = arith.constant 0 : i32
    %c0_i32_1 = arith.constant 0 : i32
    %c0_i32_2 = arith.constant 0 : i32
    return %c0_i32, %c0_i32_0, %c0_i32_1 : i32, i32, i32
  }
  func.func @transform_2(%arg0: i32) -> (i32, i32) {
    %c0_i32 = arith.constant 0 : i32
    %c0_i32_0 = arith.constant 0 : i32
    %c0_i32_1 = arith.constant 0 : i32
    return %c0_i32, %c0_i32_0 : i32, i32
  }
  func.func @transform_3(%arg0: i32) -> (i32, i32) {
    %c0_i32 = arith.constant 0 : i32
    %c0_i32_0 = arith.constant 0 : i32
    %c0_i32_1 = arith.constant 0 : i32
    return %c0_i32, %c0_i32_0 : i32, i32
  }
  func.func @transform_4(%arg0: i32) -> (i32, i32) {
    %c0_i32 = arith.constant 0 : i32
    %c0_i32_0 = arith.constant 0 : i32
    return %arg0, %c0_i32 : i32, i32
  }
  func.func @transform_5(%arg0: i32) -> (i32, i32) {
    %c0_i32 = arith.constant 0 : i32
    %c0_i32_0 = arith.constant 0 : i32
    return %arg0, %c0_i32 : i32, i32
  }
  func.func @transform_6(%arg0: i32) -> (i32, i32, i32) {
    %c0_i32 = arith.constant 0 : i32
    %c0_i32_0 = arith.constant 0 : i32
    %c0_i32_1 = arith.constant 0 : i32
    return %arg0, %c0_i32, %c0_i32_0 : i32, i32, i32
  }
}

</mosaic_0001>

<llo_original>
// kernel: tpu_custom_call.1
$region0: #{tpu_custom_call.1}
  #allocation0 [shape = 'u32[]', space=smem, size = 0x4, offset = 0x4, fixed_abs, tag = 'smem constant byte address 0x4 - core index']
  #allocation1 [shape = 'u32[144,128]{1,0:T(1,128)}', space=vmem, size = 0x12000, scoped, tag = 'internal scratch']
  #allocation2 [shape = 'f32[24,512]{1,0:T(8,128)}', space=vmem, size = 0xc000, scoped, tag = 'scratch operand']
  %s0 = inlined_call_operand.hbm [shape: f32[48,74], index: 0, kind: input, shape index: {}]
  %s1 = inlined_call_operand.hbm [shape: f32[5,74,512], index: 1, kind: input, shape index: {}]
  %s2 = inlined_call_operand.vmem [shape: f32[1,512], index: 2, kind: input, shape index: {}]
  %s3 = inlined_call_operand.vmem [shape: f32[1,512], index: 3, kind: input, shape index: {}]
  %s4 = inlined_call_operand.hbm [shape: f32[48,256], index: 4, kind: input, shape index: {}]
  %s5 = inlined_call_operand.hbm [shape: f32[48,256], index: 5, kind: output, shape index: {0}]
  %s6 = inlined_call_operand.hbm [shape: f32[2,1,256], index: 6, kind: output, shape index: {1}]
  %7 = xla_tuple %s5, %s6
  %s8 = sld [smem:[#allocation0]]
  $region73: #{tpu_custom_call.1} parent=0
    _
  %s10 = ssub.s32 1, %s8
  %s11 = scalar_select 0, %s10, %s8
  $region1: #{tpu_custom_call.1} parent=0
    #allocation3 [shape = 'u8[24576]{0}', space=vmem, size = 0x6000, scoped, tag = 'input window, operand 0']
    #allocation4 [shape = 's32[2]{0}', space=sflag, size = 0x8, scoped, tag = 'scoped memory for tpu_custom_call.1']
    #allocation5 [shape = 's32[2]{0}', space=sflag, size = 0x8, scoped, tag = 'scoped memory for tpu_custom_call.1']
    #allocation6 [shape = 'u8[819200]{0}', space=vmem, size = 0xc8000, scoped, tag = 'input window, operand 1, single buffered']
    #allocation7 [shape = 's32[1]{0}', space=sflag, size = 0x4, scoped, tag = 'scoped memory for tpu_custom_call.1']
    #allocation8 [shape = 'u8[49152]{0}', space=vmem, size = 0xc000, scoped, tag = 'input window, operand 4']
    #allocation9 [shape = 'u8[49152]{0}', space=vmem, size = 0xc000, scoped, tag = 'output window, operand 0']
    #allocation10 [shape = 'u8[2048]{0}', space=vmem, size = 0x800, scoped, tag = 'output window, operand 1']
    #allocation11 [shape = 's32[2]{0}', space=sflag, size = 0x8, scoped, tag = 'scoped memory for tpu_custom_call.1']
    %12 = vsyncpa [#allocation4], 0
    %s13 = scalar_lea.sflag [#allocation4], 1
    %14 = vsyncpa %s13, 0
    %15 = vsyncpa [#allocation7], 0
    %16 = vsyncpa [#allocation5], 0
    %s17 = scalar_lea.sflag [#allocation5], 1
    %18 = vsyncpa %s17, 0
    %19 = vsyncpa [#allocation11], 0
    %s20 = scalar_lea.sflag [#allocation11], 1
    %21 = vsyncpa %s20, 0
    loop: start=0, step=1, limit=4
    $region2: #{tpu_custom_call.1} parent=1 // loop_pre_header
      _
    $region3: #{tpu_custom_call.1} parent=1 // loop_header
      %s23 = sphi 0, %s27
      %p24 = scmp.ge.s32.totalorder %s23, 4
      %s33 = sphi 0, %s35
      %s36 = sphi 0, %s33
      %s37 = sphi 0, %s36
      %s53 = sphi 0, %s37
      %s57 = sphi 0, %s57
      %s59 = sphi 0, %s57
      %s60 = sphi 0, %s59
      %s74 = sphi 0, %s60
      %s78 = sphi 0, %s78
      %s80 = sphi 0, %s78
      %s81 = sphi 0, %s80
      %s95 = sphi 0, %s81
      %s99 = sphi 0, %s99
      %s101 = sphi 0, %s99
      %s102 = sphi 0, %s101
      %s116 = sphi 0, %s102
      %s122 = sphi 0, %s124
      %s125 = sphi 0, %s122
      %s126 = sphi 0, %s125
      %s142 = sphi 0, %s126
      %s148 = sphi 0, %s150
      %s151 = sphi 0, %s148
      %s152 = sphi 0, %s151
      %s168 = sphi 0, %s152
      %s174 = sphi 0, %s176
      %s177 = sphi 0, %s174
      %s178 = sphi 0, %s177
      %s194 = sphi 0, %s178
    $region4: #{tpu_custom_call.1} parent=1 // loop_header_branch
      %26 = sbr.rel (%p24) target = $region8
    $region5: #{tpu_custom_call.1} parent=1 // loop_body
      %s28 = ssub.s32 %s23, 1
      %s29 = ssub.s32 %s23, 2
      %s30 = sadd.s32 %s23, 1
      %s31 = ssub.s32 %s23, %s30
      %p32 = scmp.eq.s32.totalorder %s31, 0
      %s34 = sadd.s32 %s33, 1
      %s35 = scalar_select %p32, %s33, %s34
      %p38 = pneg %p32
      %p39 = scmp.eq.s32.totalorder %s23, 1
      %p40 = por %p38, %p39
      %p41 = scmp.ne.s32.totalorder %s33, %s36
      %p42 = scmp.eq.s32.totalorder %s23, 0
      %p43 = por %p41, %p42
      %p44 = scmp.ne.s32.totalorder %s33, %s36
      %p45 = scmp.eq.s32.totalorder %s28, 1
      %p46 = por %p44, %p45
      %p47 = scmp.ne.s32.totalorder %s36, %s37
      %p48 = scmp.eq.s32.totalorder %s28, 0
      %p49 = por %p47, %p48
      %p50 = scmp.ne.s32.totalorder %s36, %s37
      %p51 = scmp.eq.s32.totalorder %s29, 1
      %p52 = por %p50, %p51
      %p54 = scmp.ne.s32.totalorder %s37, %s53
      %p55 = scmp.eq.s32.totalorder %s29, 0
      %p56 = por %p54, %p55
      %s58 = sadd.s32 %s57, 1
      %p61 = scmp.eq.s32.totalorder %s23, 1
      %p62 = scmp.ne.s32.totalorder %s57, %s59
      %p63 = scmp.eq.s32.totalorder %s23, 0
      %p64 = por %p62, %p63
      %p65 = scmp.ne.s32.totalorder %s57, %s59
      %p66 = scmp.eq.s32.totalorder %s28, 1
      %p67 = por %p65, %p66
      %p68 = scmp.ne.s32.totalorder %s59, %s60
      %p69 = scmp.eq.s32.totalorder %s28, 0
      %p70 = por %p68, %p69
      %p71 = scmp.ne.s32.totalorder %s59, %s60
      %p72 = scmp.eq.s32.totalorder %s29, 1
      %p73 = por %p71, %p72
      %p75 = scmp.ne.s32.totalorder %s60, %s74
      %p76 = scmp.eq.s32.totalorder %s29, 0
      %p77 = por %p75, %p76
      %s79 = sadd.s32 %s78, 1
      %p82 = scmp.eq.s32.totalorder %s23, 1
      %p83 = scmp.ne.s32.totalorder %s78, %s80
      %p84 = scmp.eq.s32.totalorder %s23, 0
      %p85 = por %p83, %p84
      %p86 = scmp.ne.s32.totalorder %s78, %s80
      %p87 = scmp.eq.s32.totalorder %s28, 1
      %p88 = por %p86, %p87
      %p89 = scmp.ne.s32.totalorder %s80, %s81
      %p90 = scmp.eq.s32.totalorder %s28, 0
      %p91 = por %p89, %p90
      %p92 = scmp.ne.s32.totalorder %s80, %s81
      %p93 = scmp.eq.s32.totalorder %s29, 1
      %p94 = por %p92, %p93
      %p96 = scmp.ne.s32.totalorder %s81, %s95
      %p97 = scmp.eq.s32.totalorder %s29, 0
      %p98 = por %p96, %p97
      %s100 = sadd.s32 %s99, 1
      %p103 = scmp.eq.s32.totalorder %s23, 1
      %p104 = scmp.ne.s32.totalorder %s99, %s101
      %p105 = scmp.eq.s32.totalorder %s23, 0
      %p106 = por %p104, %p105
      %p107 = scmp.ne.s32.totalorder %s99, %s101
      %p108 = scmp.eq.s32.totalorder %s28, 1
      %p109 = por %p107, %p108
      %p110 = scmp.ne.s32.totalorder %s101, %s102
      %p111 = scmp.eq.s32.totalorder %s28, 0
      %p112 = por %p110, %p111
      %p113 = scmp.ne.s32.totalorder %s101, %s102
      %p114 = scmp.eq.s32.totalorder %s29, 1
      %p115 = por %p113, %p114
      %p117 = scmp.ne.s32.totalorder %s102, %s116
      %p118 = scmp.eq.s32.totalorder %s29, 0
      %p119 = por %p117, %p118
      %s120 = ssub.s32 %s23, %s30
      %p121 = scmp.eq.s32.totalorder %s120, 0
      %s123 = sadd.s32 %s122, 1
      %s124 = scalar_select %p121, %s122, %s123
      %p127 = pneg %p121
      %p128 = scmp.eq.s32.totalorder %s23, 1
      %p129 = por %p127, %p128
      %p130 = scmp.ne.s32.totalorder %s122, %s125
      %p131 = scmp.eq.s32.totalorder %s23, 0
      %p132 = por %p130, %p131
      %p133 = scmp.ne.s32.totalorder %s122, %s125
      %p134 = scmp.eq.s32.totalorder %s28, 1
      %p135 = por %p133, %p134
      %p136 = scmp.ne.s32.totalorder %s125, %s126
      %p137 = scmp.eq.s32.totalorder %s28, 0
      %p138 = por %p136, %p137
      %p139 = scmp.ne.s32.totalorder %s125, %s126
      %p140 = scmp.eq.s32.totalorder %s29, 1
      %p141 = por %p139, %p140
      %p143 = scmp.ne.s32.totalorder %s126, %s142
      %p144 = scmp.eq.s32.totalorder %s29, 0
      %p145 = por %p143, %p144
      %s146 = ssub.s32 %s23, %s30
      %p147 = scmp.eq.s32.totalorder %s146, 0
      %s149 = sadd.s32 %s148, 1
      %s150 = scalar_select %p147, %s148, %s149
      %p153 = pneg %p147
      %p154 = scmp.eq.s32.totalorder %s23, 1
      %p155 = por %p153, %p154
      %p156 = scmp.ne.s32.totalorder %s148, %s151
      %p157 = scmp.eq.s32.totalorder %s23, 0
      %p158 = por %p156, %p157
      %p159 = scmp.ne.s32.totalorder %s148, %s151
      %p160 = scmp.eq.s32.totalorder %s28, 1
      %p161 = por %p159, %p160
      %p162 = scmp.ne.s32.totalorder %s151, %s152
      %p163 = scmp.eq.s32.totalorder %s28, 0
      %p164 = por %p162, %p163
      %p165 = scmp.ne.s32.totalorder %s151, %s152
      %p166 = scmp.eq.s32.totalorder %s29, 1
      %p167 = por %p165, %p166
      %p169 = scmp.ne.s32.totalorder %s152, %s168
      %p170 = scmp.eq.s32.totalorder %s29, 0
      %p171 = por %p169, %p170
      %s172 = ssub.s32 %s23, %s30
      %p173 = scmp.eq.s32.totalorder %s172, 0
      %s175 = sadd.s32 %s174, 1
      %s176 = scalar_select %p173, %s174, %s175
      %p179 = pneg %p173
      %p180 = scmp.eq.s32.totalorder %s23, 1
      %p181 = por %p179, %p180
      %p182 = scmp.ne.s32.totalorder %s174, %s177
      %p183 = scmp.eq.s32.totalorder %s23, 0
      %p184 = por %p182, %p183
      %p185 = scmp.ne.s32.totalorder %s174, %s177
      %p186 = scmp.eq.s32.totalorder %s28, 1
      %p187 = por %p185, %p186
      %p188 = scmp.ne.s32.totalorder %s177, %s178
      %p189 = scmp.eq.s32.totalorder %s28, 0
      %p190 = por %p188, %p189
      %p191 = scmp.ne.s32.totalorder %s177, %s178
      %p192 = scmp.eq.s32.totalorder %s29, 1
      %p193 = por %p191, %p192
      %p195 = scmp.ne.s32.totalorder %s178, %s194
      %p196 = scmp.eq.s32.totalorder %s29, 0
      %p197 = por %p195, %p196
      %p198 = scmp.le.s32.totalorder 1, %s23
      %p199 = scmp.lt.s32.totalorder %s23, 3
      %p200 = pnand %p198, %p199
      %p201 = pneg %p200
      // Predicated region
      $region9: #{tpu_custom_call.1} parent=5 // pred_check
        _
      $region10: #{tpu_custom_call.1} parent=5 // pred_check_branch
        %203 = sbr.rel (%p200) target = $region12
      $region11: #{tpu_custom_call.1} parent=5 // pred_region
        %s204 = ssub.s32 %s23, 1
        // Predicated region
        $region13: #{tpu_custom_call.1} parent=11 // pred_check
          %p205 = pneg %p70
        $region14: #{tpu_custom_call.1} parent=11 // pred_check_branch
          %207 = sbr.rel (%p205) target = $region16
        $region15: #{tpu_custom_call.1} parent=11 // pred_region
          %s209 = ssub.s32 25600, 25600
          %210 = vsyncadd [#allocation7], %s209
          %s211 = sshll.u32 [#allocation6], 4
          %s212 = int_to_ptr.vmem [resolvable:$true] %s211
          %217 = dma.hbm_to_vmem [thread:$0]  %s1, 25600, %s212, [#allocation7], 512, 512, 32
        $region16: #{tpu_custom_call.1} parent=11 // pred_fallthru
          _
        // Predicated region
        $region17: #{tpu_custom_call.1} parent=11 // pred_check
          %p218 = pneg %p91
        $region18: #{tpu_custom_call.1} parent=11 // pred_check_branch
          %220 = sbr.rel (%p218) target = $region20
        $region19: #{tpu_custom_call.1} parent=11 // pred_region
          _
        $region20: #{tpu_custom_call.1} parent=11 // pred_fallthru
          _
        // Predicated region
        $region21: #{tpu_custom_call.1} parent=11 // pred_check
          %p221 = pneg %p112
        $region22: #{tpu_custom_call.1} parent=11 // pred_check_branch
          %223 = sbr.rel (%p221) target = $region24
        $region23: #{tpu_custom_call.1} parent=11 // pred_region
          _
        $region24: #{tpu_custom_call.1} parent=11 // pred_fallthru
          _
      $region12: #{tpu_custom_call.1} parent=5 // pred_fallthru
        _
      %p224 = scmp.lt.s32.totalorder %s23, 2
      // Predicated region
      $region25: #{tpu_custom_call.1} parent=5 // pred_check
        %p225 = pneg %p224
      $region26: #{tpu_custom_call.1} parent=5 // pred_check_branch
        %227 = sbr.rel (%p225) target = $region28
      $region27: #{tpu_custom_call.1} parent=5 // pred_region
        // Predicated region
        $region29: #{tpu_custom_call.1} parent=27 // pred_check
          %p228 = pneg %p43
        $region30: #{tpu_custom_call.1} parent=27 // pred_check_branch
          %230 = sbr.rel (%p228) target = $region32
        $region31: #{tpu_custom_call.1} parent=27 // pred_region
          %s231 = sand.u32 %s23, 1
          %s232 = scalar_lea.sflag [#allocation4], %s231
          %s233 = sand.u32 %s33, 1
          %s234 = smul.addr %s233, 24
          %s235 = scalar_lea.vmem [#allocation3], %s234
          %s236 = smul.u32 3, %s23
          %s238 = ssub.s32 384, 384
          %239 = vsyncadd %s232, %s238
          %s240 = smul.addr %s236, 128
          %s241 = scalar_lea.hbm %s0, %s240
          %s242 = sshll.u32 %s235, 4
          %s243 = int_to_ptr.vmem [resolvable:$true] %s242
          %248 = dma.hbm_to_vmem [thread:$0]  %s241, 384, %s243, %s232, 128, 128, 8
        $region32: #{tpu_custom_call.1} parent=27 // pred_fallthru
          _
        // Predicated region
        $region33: #{tpu_custom_call.1} parent=27 // pred_check
          %p249 = pneg %p132
        $region34: #{tpu_custom_call.1} parent=27 // pred_check_branch
          %251 = sbr.rel (%p249) target = $region36
        $region35: #{tpu_custom_call.1} parent=27 // pred_region
          %s252 = sand.u32 %s23, 1
          %s253 = scalar_lea.sflag [#allocation4], %s252
          %s254 = sand.u32 %s122, 1
          %s255 = smul.addr %s254, 48
          %s256 = scalar_lea.vmem [#allocation8], %s255
          %s257 = smul.u32 3, %s23
          %s259 = ssub.s32 768, 768
          %260 = vsyncadd %s253, %s259
          %s261 = smul.addr %s257, 2
          %s262 = smul.addr %s261, 128
          %s263 = scalar_lea.hbm %s4, %s262
          %s264 = sshll.u32 %s256, 4
          %s265 = int_to_ptr.vmem [resolvable:$true] %s264
          %270 = dma.hbm_to_vmem [thread:$0]  %s263, 768, %s265, %s253, 256, 256, 16
        $region36: #{tpu_custom_call.1} parent=27 // pred_fallthru
          _
      $region28: #{tpu_custom_call.1} parent=5 // pred_fallthru
        _
      %p271 = scmp.le.s32.totalorder 1, %s23
      %p272 = scmp.lt.s32.totalorder %s23, 3
      %p273 = pnand %p271, %p272
      %p274 = pneg %p273
      // Predicated region
      $region37: #{tpu_custom_call.1} parent=5 // pred_check
        _
      $region38: #{tpu_custom_call.1} parent=5 // pred_check_branch
        %276 = sbr.rel (%p273) target = $region40
      $region39: #{tpu_custom_call.1} parent=5 // pred_region
        %s277 = ssub.s32 %s23, 1
        %s278 = sand.u32 %s28, 1
        %s279 = scalar_lea.sflag [#allocation4], %s278
        %s280 = sand.u32 %s36, 1
        %s281 = smul.addr %s280, 24
        %s282 = scalar_lea.vmem [#allocation3], %s281
        // Predicated region
        $region41: #{tpu_custom_call.1} parent=39 // pred_check
          %p283 = pneg %p49
        $region42: #{tpu_custom_call.1} parent=39 // pred_check_branch
          %285 = sbr.rel (%p283) target = $region44
        $region43: #{tpu_custom_call.1} parent=39 // pred_region
          %286 = dma.done %s279, 384
        $region44: #{tpu_custom_call.1} parent=39 // pred_fallthru
          _
        // Predicated region
        $region45: #{tpu_custom_call.1} parent=39 // pred_check
          %p287 = pneg %p70
        $region46: #{tpu_custom_call.1} parent=39 // pred_check_branch
          %289 = sbr.rel (%p287) target = $region48
        $region47: #{tpu_custom_call.1} parent=39 // pred_region
          %290 = dma.done [#allocation7], 25600
        $region48: #{tpu_custom_call.1} parent=39 // pred_fallthru
          _
        %s291 = sand.u32 %s28, 1
        %s292 = scalar_lea.sflag [#allocation4], %s291
        %s293 = sand.u32 %s125, 1
        %s294 = smul.addr %s293, 48
        %s295 = scalar_lea.vmem [#allocation8], %s294
        // Predicated region
        $region49: #{tpu_custom_call.1} parent=39 // pred_check
          %p296 = pneg %p138
        $region50: #{tpu_custom_call.1} parent=39 // pred_check_branch
          %298 = sbr.rel (%p296) target = $region52
        $region51: #{tpu_custom_call.1} parent=39 // pred_region
          %299 = dma.done %s292, 768
        $region52: #{tpu_custom_call.1} parent=39 // pred_fallthru
          _
        %s300 = sand.u32 %s28, 1
        %s301 = scalar_lea.sflag [#allocation4], %s300
        %s302 = sand.u32 %s36, 1
        %s303 = smul.addr %s302, 24
        %s304 = scalar_lea.vmem [#allocation3], %s303
        %p305 = pneg %p49
        %p306 = pneg %p46
        %p307 = pneg %p70
        %p308 = pneg %p67
        %p309 = pneg %p91
        %p310 = pneg %p88
        %p311 = pneg %p112
        %p312 = pneg %p109
        %s313 = sand.u32 %s28, 1
        %s314 = scalar_lea.sflag [#allocation4], %s313
        %s315 = sand.u32 %s125, 1
        %s316 = smul.addr %s315, 48
        %s317 = scalar_lea.vmem [#allocation8], %s316
        %p318 = pneg %p138
        %p319 = pneg %p135
        %p320 = pneg %p164
        %p321 = pneg %p161
        %s322 = sand.u32 %s151, 1
        %s323 = scalar_lea.sflag [#allocation5], %s322
        %s324 = sand.u32 %s151, 1
        %s325 = smul.addr %s324, 48
        %s326 = scalar_lea.vmem [#allocation9], %s325
        %p327 = pneg %p190
        %p328 = pneg %p187
        %s329 = sand.u32 %s177, 1
        %s330 = scalar_lea.sflag [#allocation11], %s329
        %s331 = sand.u32 %s177, 1
        %s332 = smul.addr %s331, 2
        %s333 = scalar_lea.vmem [#allocation10], %s332
        %s334 = smul.u32 3, %s28
        %s335 = smul.u32 3, %s28
        %s336 = smul.u32 3, %s28
        %v337 = vld [vmem:[%s282] sm:$0xff]
        %v338 = vld [vmem:[%s282 + $0x8] sm:$0xff]
        %v339 = vld [vmem:[%s282 + $0x10] sm:$0xff]
        %v340 = vld [vmem:[#allocation6] sm:$0xff]
        %v341 = vld [vmem:[#allocation6 + $0x8] sm:$0xff]
        %v342 = vld [vmem:[#allocation6 + $0x10] sm:$0xff]
        %v343 = vld [vmem:[#allocation6 + $0x18] sm:$0xff]
        %v344 = vld [vmem:[#allocation6 + $0x20] sm:$0xff]
        %v345 = vld [vmem:[#allocation6 + $0x28] sm:$0xff]
        %v346 = vld [vmem:[#allocation6 + $0x30] sm:$0xff]
        %v347 = vld [vmem:[#allocation6 + $0x38] sm:$0xff]
        %v348 = vld [vmem:[#allocation6 + $0x40] sm:$0xff]
        %v349 = vld [vmem:[#allocation6 + $0x48] sm:$0xff]
        %v350 = vld [vmem:[#allocation6 + $0x50] sm:$0xff]
        %v351 = vld [vmem:[#allocation6 + $0x58] sm:$0xff]
        %v352 = vld [vmem:[#allocation6 + $0x60] sm:$0xff]
        %v353 = vld [vmem:[#allocation6 + $0x68] sm:$0xff]
        %v354 = vld [vmem:[#allocation6 + $0x70] sm:$0xff]
        %v355 = vld [vmem:[#allocation6 + $0x78] sm:$0xff]
        %v356 = vld [vmem:[#allocation6 + $0x80] sm:$0xff]
        %v357 = vld [vmem:[#allocation6 + $0x88] sm:$0xff]
        %v358 = vld [vmem:[#allocation6 + $0x90] sm:$0xff]
        %v359 = vld [vmem:[#allocation6 + $0x98] sm:$0xff]
        %v360 = vld [vmem:[#allocation6 + $0xa0] sm:$0xff]
        %v361 = vld [vmem:[#allocation6 + $0xa8] sm:$0xff]
        %v362 = vld [vmem:[#allocation6 + $0xb0] sm:$0xff]
        %v363 = vld [vmem:[#allocation6 + $0xb8] sm:$0xff]
        %v364 = vld [vmem:[#allocation6 + $0xc0] sm:$0xff]
        %v365 = vld [vmem:[#allocation6 + $0xc8] sm:$0xff]
        %v366 = vld [vmem:[#allocation6 + $0xd0] sm:$0xff]
        %v367 = vld [vmem:[#allocation6 + $0xd8] sm:$0xff]
        %v368 = vld [vmem:[#allocation6 + $0xe0] sm:$0xff]
        %v369 = vld [vmem:[#allocation6 + $0xe8] sm:$0xff]
        %v370 = vld [vmem:[#allocation6 + $0xf0] sm:$0xff]
        %v371 = vld [vmem:[#allocation6 + $0xf8] sm:$0xff]
        %v372 = vld [vmem:[#allocation6 + $0x100] sm:$0xff]
        %v373 = vld [vmem:[#allocation6 + $0x108] sm:$0xff]
        %v374 = vld [vmem:[#allocation6 + $0x110] sm:$0xff]
        %v375 = vld [vmem:[#allocation6 + $0x118] sm:$0xff]
        %v376 = vld [vmem:[#allocation6 + $0x120] sm:$0x3]
        %v377 = vld [vmem:[#allocation6 + $0x128] sm:$0x3]
        %v378 = vld [vmem:[#allocation6 + $0x130] sm:$0x3]
        %v379 = vld [vmem:[#allocation6 + $0x138] sm:$0x3]
        %vm380 = vcmask 605184
        %v382 = vsel %vm380, %v337, 0
        %v385 = vsel %vm380, %v338, 0
        %v388 = vsel %vm380, %v339, 0
        %vm390 = vcmask 1041408
        %v392 = vsel %vm390, %v376, 0
        %v395 = vsel %vm390, %v377, 0
        %v398 = vsel %vm390, %v378, 0
        %v401 = vsel %vm390, %v379, 0
        %403 = vmatprep.subr.mxu0 %v341
        %404 = vmatpush1.msra.mxu0 %v340
        %405 = vmatprep.subr.mxu0 %v345
        %406 = vmatpush1.msra.mxu0 %v344
        %407 = vmatprep.subr.mxu0 %v349
        %408 = vmatpush1.msra.mxu0 %v348
        %409 = vmatprep.subr.mxu0 %v353
        %410 = vmatpush1.msra.mxu0 %v352
        %411 = vmatprep.subr.mxu0 %v357
        %412 = vmatpush1.msra.mxu0 %v356
        %413 = vmatprep.subr.mxu0 %v361
        %414 = vmatpush1.msra.mxu0 %v360
        %415 = vmatprep.subr.mxu0 %v365
        %416 = vmatpush1.msra.mxu0 %v364
        %417 = vmatprep.subr.mxu0 %v369
        %418 = vmatpush1.msra.mxu0 %v368
        %419 = vmatprep.subr.mxu0 %v373
        %420 = vmatpush1.msra.mxu0 %v372
        %421 = vmatprep.subr.mxu0 %v395
        %422 = vmatpush1.msra.mxu0 %v392
        %423 = vmatprep.subr.mxu0 0.0
        %424 = vmatpush1.msra.mxu0 0.0
        %425 = vmatprep.subr.mxu0 0.0
        %426 = vmatpush1.msra.mxu0 0.0
        %427 = vmatprep.subr.mxu0 0.0
        %428 = vmatpush1.msra.mxu0 0.0
        %429 = vmatprep.subr.mxu0 0.0
        %430 = vmatpush1.msra.mxu0 0.0
        %431 = vmatprep.subr.mxu0 0.0
        %432 = vmatpush1.msra.mxu0 0.0
        %433 = vmatprep.subr.mxu0 0.0
        %434 = vmatpush1.msra.mxu0 0.0
        %435 = vmatprep.subr.mxu0 0.0
        %436 = vmatpush1.msra.mxu0 0.0
        %437 = vmatprep.subr.mxu0 0.0
        %438 = vmatpush1.msra.mxu0 0.0
        %439 = vmatprep.subr.mxu0 0.0
        %440 = vmatpush1.msra.mxu0 0.0
        %441 = vmatprep.subr.mxu0 0.0
        %442 = vmatpush1.msra.mxu0 0.0
        %443 = vmatprep.subr.mxu0 0.0
        %444 = vmatpush1.msra.mxu0 0.0
        %445 = vmatprep.subr.mxu0 0.0
        %446 = vmatpush1.msra.mxu0 0.0
        %447 = vmatprep.subr.mxu0 0.0
        %448 = vmatpush1.msra.mxu0 0.0
        %449 = vmatprep.subr.mxu0 0.0
        %450 = vmatpush1.msra.mxu0 0.0
        %451 = vmatprep.subr.mxu0 0.0
        %452 = vmatpush1.msra.mxu0 0.0
        %453 = vmatprep.subr.mxu0 0.0
        %454 = vmatpush1.msra.mxu0 0.0
        %455 = vmatprep.subr.mxu0 0.0
        %456 = vmatpush1.msra.mxu0 0.0
        %457 = vmatprep.subr.mxu0 0.0
        %458 = vmatpush1.msra.mxu0 0.0
        %459 = vmatprep.subr.mxu0 0.0
        %460 = vmatpush1.msra.mxu0 0.0
        %461 = vmatprep.subr.mxu0 0.0
        %462 = vmatpush1.msra.mxu0 0.0
        %463 = vmatprep.subr.mxu0 0.0
        %464 = vmatpush1.msra.mxu0 0.0
        %465 = vmatprep.subr.mxu0 0.0
        %466 = vmatpush1.msra.mxu0 0.0
        %467 = vmatprep.mubr.f32.mxu0 0.0
        %468 = vmatmul.mubr.f32.gmra.mrb[0].mxu0 %v382
        %v469 = vpop.f32.mrb[0].mxu0
        %v470 = vadd.f32 0.0, %v469
        %v471 = vpop.f32.mrb[0].mxu0
        %v472 = vadd.f32 0.0, %v471
        %473 = vmatprep.mubr.f32.mxu0 0.0
        %474 = vmatmul.mubr.f32.gmra.mrb[0].mxu0 %v385
        %v475 = vpop.f32.mrb[0].mxu0
        %v476 = vadd.f32 0.0, %v475
        %v477 = vpop.f32.mrb[0].mxu0
        %v478 = vadd.f32 0.0, %v477
        %479 = vmatprep.mubr.f32.mxu0 0.0
        %480 = vmatmul.mubr.f32.gmra.mrb[0].mxu0 %v388
        %v481 = vpop.f32.mrb[0].mxu0
        %v482 = vadd.f32 0.0, %v481
        %v483 = vpop.f32.mrb[0].mxu0
        %v484 = vadd.f32 0.0, %v483
        %485 = vdwg.mxu0
        %486 = vmatprep.subr.mxu0 %v343
        %487 = vmatpush1.msra.mxu0 %v342
        %488 = vmatprep.subr.mxu0 %v347
        %489 = vmatpush1.msra.mxu0 %v346
        %490 = vmatprep.subr.mxu0 %v351
        %491 = vmatpush1.msra.mxu0 %v350
        %492 = vmatprep.subr.mxu0 %v355
        %493 = vmatpush1.msra.mxu0 %v354
        %494 = vmatprep.subr.mxu0 %v359
        %495 = vmatpush1.msra.mxu0 %v358
        %496 = vmatprep.subr.mxu0 %v363
        %497 = vmatpush1.msra.mxu0 %v362
        %498 = vmatprep.subr.mxu0 %v367
        %499 = vmatpush1.msra.mxu0 %v366
        %500 = vmatprep.subr.mxu0 %v371
        %501 = vmatpush1.msra.mxu0 %v370
        %502 = vmatprep.subr.mxu0 %v375
        %503 = vmatpush1.msra.mxu0 %v374
        %504 = vmatprep.subr.mxu0 %v401
        %505 = vmatpush1.msra.mxu0 %v398
        %506 = vmatprep.subr.mxu0 0.0
        %507 = vmatpush1.msra.mxu0 0.0
        %508 = vmatprep.subr.mxu0 0.0
        %509 = vmatpush1.msra.mxu0 0.0
        %510 = vmatprep.subr.mxu0 0.0
        %511 = vmatpush1.msra.mxu0 0.0
        %512 = vmatprep.subr.mxu0 0.0
        %513 = vmatpush1.msra.mxu0 0.0
        %514 = vmatprep.subr.mxu0 0.0
        %515 = vmatpush1.msra.mxu0 0.0
        %516 = vmatprep.subr.mxu0 0.0
        %517 = vmatpush1.msra.mxu0 0.0
        %518 = vmatprep.subr.mxu0 0.0
        %519 = vmatpush1.msra.mxu0 0.0
        %520 = vmatprep.subr.mxu0 0.0
        %521 = vmatpush1.msra.mxu0 0.0
        %522 = vmatprep.subr.mxu0 0.0
        %523 = vmatpush1.msra.mxu0 0.0
        %524 = vmatprep.subr.mxu0 0.0
        %525 = vmatpush1.msra.mxu0 0.0
        %526 = vmatprep.subr.mxu0 0.0
        %527 = vmatpush1.msra.mxu0 0.0
        %528 = vmatprep.subr.mxu0 0.0
        %529 = vmatpush1.msra.mxu0 0.0
        %530 = vmatprep.subr.mxu0 0.0
        %531 = vmatpush1.msra.mxu0 0.0
        %532 = vmatprep.subr.mxu0 0.0
        %533 = vmatpush1.msra.mxu0 0.0
        %534 = vmatprep.subr.mxu0 0.0
        %535 = vmatpush1.msra.mxu0 0.0
        %536 = vmatprep.subr.mxu0 0.0
        %537 = vmatpush1.msra.mxu0 0.0
        %538 = vmatprep.subr.mxu0 0.0
        %539 = vmatpush1.msra.mxu0 0.0
        %540 = vmatprep.subr.mxu0 0.0
        %541 = vmatpush1.msra.mxu0 0.0
        %542 = vmatprep.subr.mxu0 0.0
        %543 = vmatpush1.msra.mxu0 0.0
        %544 = vmatprep.subr.mxu0 0.0
        %545 = vmatpush1.msra.mxu0 0.0
        %546 = vmatprep.subr.mxu0 0.0
        %547 = vmatpush1.msra.mxu0 0.0
        %548 = vmatprep.subr.mxu0 0.0
        %549 = vmatpush1.msra.mxu0 0.0
        %550 = vmatprep.mubr.f32.mxu0 0.0
        %551 = vmatmul.mubr.f32.gmra.mrb[0].mxu0 %v382
        %v552 = vpop.f32.mrb[0].mxu0
        %v553 = vadd.f32 0.0, %v552
        %v554 = vpop.f32.mrb[0].mxu0
        %v555 = vadd.f32 0.0, %v554
        %556 = vmatprep.mubr.f32.mxu0 0.0
        %557 = vmatmul.mubr.f32.gmra.mrb[0].mxu0 %v385
        %v558 = vpop.f32.mrb[0].mxu0
        %v559 = vadd.f32 0.0, %v558
        %v560 = vpop.f32.mrb[0].mxu0
        %v561 = vadd.f32 0.0, %v560
        %562 = vmatprep.mubr.f32.mxu0 0.0
        %563 = vmatmul.mubr.f32.gmra.mrb[0].mxu0 %v388
        %v564 = vpop.f32.mrb[0].mxu0
        %v565 = vadd.f32 0.0, %v564
        %v566 = vpop.f32.mrb[0].mxu0
        %v567 = vadd.f32 0.0, %v566
        %568 = vdwg.mxu0
        %569 = vst [vmem:[#allocation2] sm:$0xff] %v470
        %570 = vst [vmem:[#allocation2 + $0x8] sm:$0xff] %v472
        %571 = vst [vmem:[#allocation2 + $0x10] sm:$0xff] %v553
        %572 = vst [vmem:[#allocation2 + $0x18] sm:$0xff] %v555
        %573 = vst [vmem:[#allocation2 + $0x20] sm:$0xff] %v476
        %574 = vst [vmem:[#allocation2 + $0x28] sm:$0xff] %v478
        %575 = vst [vmem:[#allocation2 + $0x30] sm:$0xff] %v559
        %576 = vst [vmem:[#allocation2 + $0x38] sm:$0xff] %v561
        %577 = vst [vmem:[#allocation2 + $0x40] sm:$0xff] %v482
        %578 = vst [vmem:[#allocation2 + $0x48] sm:$0xff] %v484
        %579 = vst [vmem:[#allocation2 + $0x50] sm:$0xff] %v565
        %580 = vst [vmem:[#allocation2 + $0x58] sm:$0xff] %v567
        %v581 = vld [vmem:[#allocation2] sm:$0xff]
        %v582 = vld [vmem:[#allocation2 + $0x8] sm:$0xff]
        %v583 = vld [vmem:[#allocation2 + $0x10] sm:$0xff]
        %v584 = vld [vmem:[#allocation2 + $0x18] sm:$0xff]
        %v585 = vld [vmem:[#allocation2 + $0x20] sm:$0xff]
        %v586 = vld [vmem:[#allocation2 + $0x28] sm:$0xff]
        %v587 = vld [vmem:[#allocation2 + $0x30] sm:$0xff]
        %v588 = vld [vmem:[#allocation2 + $0x38] sm:$0xff]
        %v589 = vld [vmem:[#allocation2 + $0x40] sm:$0x7f]
        %v590 = vld [vmem:[#allocation2 + $0x48] sm:$0x7f]
        %v591 = vld [vmem:[#allocation2 + $0x50] sm:$0x7f]
        %v592 = vld [vmem:[#allocation2 + $0x58] sm:$0x7f]
        %v593 = vld [vmem:[%s282 + $0x1] sm:$0xff]
        %v594 = vld [vmem:[%s282 + $0x9] sm:$0xff]
        %v595 = vld [vmem:[%s282 + $0x11] sm:$0x7f]
        %s596 = scalar_lea.vmem [#allocation6], 320
        %v597 = vld [vmem:[%s596] sm:$0xff]
        %v598 = vld [vmem:[%s596 + $0x8] sm:$0xff]
        %v599 = vld [vmem:[%s596 + $0x10] sm:$0xff]
        %v600 = vld [vmem:[%s596 + $0x18] sm:$0xff]
        %v601 = vld [vmem:[%s596 + $0x20] sm:$0xff]
        %v602 = vld [vmem:[%s596 + $0x28] sm:$0xff]
        %v603 = vld [vmem:[%s596 + $0x30] sm:$0xff]
        %v604 = vld [vmem:[%s596 + $0x38] sm:$0xff]
        %v605 = vld [vmem:[%s596 + $0x40] sm:$0xff]
        %v606 = vld [vmem:[%s596 + $0x48] sm:$0xff]
        %v607 = vld [vmem:[%s596 + $0x50] sm:$0xff]
        %v608 = vld [vmem:[%s596 + $0x58] sm:$0xff]
        %v609 = vld [vmem:[%s596 + $0x60] sm:$0xff]
        %v610 = vld [vmem:[%s596 + $0x68] sm:$0xff]
        %v611 = vld [vmem:[%s596 + $0x70] sm:$0xff]
        %v612 = vld [vmem:[%s596 + $0x78] sm:$0xff]
        %v613 = vld [vmem:[%s596 + $0x80] sm:$0xff]
        %v614 = vld [vmem:[%s596 + $0x88] sm:$0xff]
        %v615 = vld [vmem:[%s596 + $0x90] sm:$0xff]
        %v616 = vld [vmem:[%s596 + $0x98] sm:$0xff]
        %v617 = vld [vmem:[%s596 + $0xa0] sm:$0xff]
        %v618 = vld [vmem:[%s596 + $0xa8] sm:$0xff]
        %v619 = vld [vmem:[%s596 + $0xb0] sm:$0xff]
        %v620 = vld [vmem:[%s596 + $0xb8] sm:$0xff]
        %v621 = vld [vmem:[%s596 + $0xc0] sm:$0xff]
        %v622 = vld [vmem:[%s596 + $0xc8] sm:$0xff]
        %v623 = vld [vmem:[%s596 + $0xd0] sm:$0xff]
        %v624 = vld [vmem:[%s596 + $0xd8] sm:$0xff]
        %v625 = vld [vmem:[%s596 + $0xe0] sm:$0xff]
        %v626 = vld [vmem:[%s596 + $0xe8] sm:$0xff]
        %v627 = vld [vmem:[%s596 + $0xf0] sm:$0xff]
        %v628 = vld [vmem:[%s596 + $0xf8] sm:$0xff]
        %v629 = vld [vmem:[%s596 + $0x100] sm:$0xff]
        %v630 = vld [vmem:[%s596 + $0x108] sm:$0xff]
        %v631 = vld [vmem:[%s596 + $0x110] sm:$0xff]
        %v632 = vld [vmem:[%s596 + $0x118] sm:$0xff]
        %v633 = vld [vmem:[%s596 + $0x120] sm:$0x3]
        %v634 = vld [vmem:[%s596 + $0x128] sm:$0x3]
        %v635 = vld [vmem:[%s596 + $0x130] sm:$0x3]
        %v636 = vld [vmem:[%s596 + $0x138] sm:$0x3]
        %v638 = vsel %vm380, %v593, 0
        %v641 = vsel %vm380, %v594, 0
        %v644 = vsel %vm380, %v595, 0
        %v647 = vsel %vm390, %v633, 0
        %v650 = vsel %vm390, %v634, 0
        %v653 = vsel %vm390, %v635, 0
        %v656 = vsel %vm390, %v636, 0
        %658 = vmatprep.subr.mxu0 %v598
        %659 = vmatpush1.msra.mxu0 %v597
        %660 = vmatprep.subr.mxu0 %v602
        %661 = vmatpush1.msra.mxu0 %v601
        %662 = vmatprep.subr.mxu0 %v606
        %663 = vmatpush1.msra.mxu0 %v605
        %664 = vmatprep.subr.mxu0 %v610
        %665 = vmatpush1.msra.mxu0 %v609
        %666 = vmatprep.subr.mxu0 %v614
        %667 = vmatpush1.msra.mxu0 %v613
        %668 = vmatprep.subr.mxu0 %v618
        %669 = vmatpush1.msra.mxu0 %v617
        %670 = vmatprep.subr.mxu0 %v622
        %671 = vmatpush1.msra.mxu0 %v621
        %672 = vmatprep.subr.mxu0 %v626
        %673 = vmatpush1.msra.mxu0 %v625
        %674 = vmatprep.subr.mxu0 %v630
        %675 = vmatpush1.msra.mxu0 %v629
        %676 = vmatprep.subr.mxu0 %v650
        %677 = vmatpush1.msra.mxu0 %v647
        %678 = vmatprep.subr.mxu0 0.0
        %679 = vmatpush1.msra.mxu0 0.0
        %680 = vmatprep.subr.mxu0 0.0
        %681 = vmatpush1.msra.mxu0 0.0
        %682 = vmatprep.subr.mxu0 0.0
        %683 = vmatpush1.msra.mxu0 0.0
        %684 = vmatprep.subr.mxu0 0.0
        %685 = vmatpush1.msra.mxu0 0.0
        %686 = vmatprep.subr.mxu0 0.0
        %687 = vmatpush1.msra.mxu0 0.0
        %688 = vmatprep.subr.mxu0 0.0
        %689 = vmatpush1.msra.mxu0 0.0
        %690 = vmatprep.subr.mxu0 0.0
        %691 = vmatpush1.msra.mxu0 0.0
        %692 = vmatprep.subr.mxu0 0.0
        %693 = vmatpush1.msra.mxu0 0.0
        %694 = vmatprep.subr.mxu0 0.0
        %695 = vmatpush1.msra.mxu0 0.0
        %696 = vmatprep.subr.mxu0 0.0
        %697 = vmatpush1.msra.mxu0 0.0
        %698 = vmatprep.subr.mxu0 0.0
        %699 = vmatpush1.msra.mxu0 0.0
        %700 = vmatprep.subr.mxu0 0.0
        %701 = vmatpush1.msra.mxu0 0.0
        %702 = vmatprep.subr.mxu0 0.0
        %703 = vmatpush1.msra.mxu0 0.0
        %704 = vmatprep.subr.mxu0 0.0
        %705 = vmatpush1.msra.mxu0 0.0
        %706 = vmatprep.subr.mxu0 0.0
        %707 = vmatpush1.msra.mxu0 0.0
        %708 = vmatprep.subr.mxu0 0.0
        %709 = vmatpush1.msra.mxu0 0.0
        %710 = vmatprep.subr.mxu0 0.0
        %711 = vmatpush1.msra.mxu0 0.0
        %712 = vmatprep.subr.mxu0 0.0
        %713 = vmatpush1.msra.mxu0 0.0
        %714 = vmatprep.subr.mxu0 0.0
        %715 = vmatpush1.msra.mxu0 0.0
        %716 = vmatprep.subr.mxu0 0.0
        %717 = vmatpush1.msra.mxu0 0.0
        %718 = vmatprep.subr.mxu0 0.0
        %719 = vmatpush1.msra.mxu0 0.0
        %720 = vmatprep.subr.mxu0 0.0
        %721 = vmatpush1.msra.mxu0 0.0
        %722 = vmatprep.mubr.f32.mxu0 0.0
        %723 = vmatmul.mubr.f32.gmra.mrb[0].mxu0 %v638
        %v724 = vpop.f32.mrb[0].mxu0
        %v725 = vadd.f32 0.0, %v724
        %v726 = vpop.f32.mrb[0].mxu0
        %v727 = vadd.f32 0.0, %v726
        %728 = vmatprep.mubr.f32.mxu0 0.0
        %729 = vmatmul.mubr.f32.gmra.mrb[0].mxu0 %v641
        %v730 = vpop.f32.mrb[0].mxu0
        %v731 = vadd.f32 0.0, %v730
        %v732 = vpop.f32.mrb[0].mxu0
        %v733 = vadd.f32 0.0, %v732
        %734 = vmatprep.mubr.f32.mxu0 0.0
        %735 = vmatmul.mubr.f32.gmra.mrb[0].mxu0 %v644
        %v736 = vpop.f32.mrb[0].mxu0
        %v737 = vadd.f32 0.0, %v736
        %v738 = vpop.f32.mrb[0].mxu0
        %v739 = vadd.f32 0.0, %v738
        %740 = vdwg.mxu0
        %741 = vmatprep.subr.mxu0 %v600
        %742 = vmatpush1.msra.mxu0 %v599
        %743 = vmatprep.subr.mxu0 %v604
        %744 = vmatpush1.msra.mxu0 %v603
        %745 = vmatprep.subr.mxu0 %v608
        %746 = vmatpush1.msra.mxu0 %v607
        %747 = vmatprep.subr.mxu0 %v612
        %748 = vmatpush1.msra.mxu0 %v611
        %749 = vmatprep.subr.mxu0 %v616
        %750 = vmatpush1.msra.mxu0 %v615
        %751 = vmatprep.subr.mxu0 %v620
        %752 = vmatpush1.msra.mxu0 %v619
        %753 = vmatprep.subr.mxu0 %v624
        %754 = vmatpush1.msra.mxu0 %v623
        %755 = vmatprep.subr.mxu0 %v628
        %756 = vmatpush1.msra.mxu0 %v627
        %757 = vmatprep.subr.mxu0 %v632
        %758 = vmatpush1.msra.mxu0 %v631
        %759 = vmatprep.subr.mxu0 %v656
        %760 = vmatpush1.msra.mxu0 %v653
        %761 = vmatprep.subr.mxu0 0.0
        %762 = vmatpush1.msra.mxu0 0.0
        %763 = vmatprep.subr.mxu0 0.0
        %764 = vmatpush1.msra.mxu0 0.0
        %765 = vmatprep.subr.mxu0 0.0
        %766 = vmatpush1.msra.mxu0 0.0
        %767 = vmatprep.subr.mxu0 0.0
        %768 = vmatpush1.msra.mxu0 0.0
        %769 = vmatprep.subr.mxu0 0.0
        %770 = vmatpush1.msra.mxu0 0.0
        %771 = vmatprep.subr.mxu0 0.0
        %772 = vmatpush1.msra.mxu0 0.0
        %773 = vmatprep.subr.mxu0 0.0
        %774 = vmatpush1.msra.mxu0 0.0
        %775 = vmatprep.subr.mxu0 0.0
        %776 = vmatpush1.msra.mxu0 0.0
        %777 = vmatprep.subr.mxu0 0.0
        %778 = vmatpush1.msra.mxu0 0.0
        %779 = vmatprep.subr.mxu0 0.0
        %780 = vmatpush1.msra.mxu0 0.0
        %781 = vmatprep.subr.mxu0 0.0
        %782 = vmatpush1.msra.mxu0 0.0
        %783 = vmatprep.subr.mxu0 0.0
        %784 = vmatpush1.msra.mxu0 0.0
        %785 = vmatprep.subr.mxu0 0.0
        %786 = vmatpush1.msra.mxu0 0.0
        %787 = vmatprep.subr.mxu0 0.0
        %788 = vmatpush1.msra.mxu0 0.0
        %789 = vmatprep.subr.mxu0 0.0
        %790 = vmatpush1.msra.mxu0 0.0
        %791 = vmatprep.subr.mxu0 0.0
        %792 = vmatpush1.msra.mxu0 0.0
        %793 = vmatprep.subr.mxu0 0.0
        %794 = vmatpush1.msra.mxu0 0.0
        %795 = vmatprep.subr.mxu0 0.0
        %796 = vmatpush1.msra.mxu0 0.0
        %797 = vmatprep.subr.mxu0 0.0
        %798 = vmatpush1.msra.mxu0 0.0
        %799 = vmatprep.subr.mxu0 0.0
        %800 = vmatpush1.msra.mxu0 0.0
        %801 = vmatprep.subr.mxu0 0.0
        %802 = vmatpush1.msra.mxu0 0.0
        %803 = vmatprep.subr.mxu0 0.0
        %804 = vmatpush1.msra.mxu0 0.0
        %805 = vmatprep.mubr.f32.mxu0 0.0
        %806 = vmatmul.mubr.f32.gmra.mrb[0].mxu0 %v638
        %v807 = vpop.f32.mrb[0].mxu0
        %v808 = vadd.f32 0.0, %v807
        %v809 = vpop.f32.mrb[0].mxu0
        %v810 = vadd.f32 0.0, %v809
        %811 = vmatprep.mubr.f32.mxu0 0.0
        %812 = vmatmul.mubr.f32.gmra.mrb[0].mxu0 %v641
        %v813 = vpop.f32.mrb[0].mxu0
        %v814 = vadd.f32 0.0, %v813
        %v815 = vpop.f32.mrb[0].mxu0
        %v816 = vadd.f32 0.0, %v815
        %817 = vmatprep.mubr.f32.mxu0 0.0
        %818 = vmatmul.mubr.f32.gmra.mrb[0].mxu0 %v644
        %v819 = vpop.f32.mrb[0].mxu0
        %v820 = vadd.f32 0.0, %v819
        %v821 = vpop.f32.mrb[0].mxu0
        %v822 = vadd.f32 0.0, %v821
        %823 = vdwg.mxu0
        %v824 = vadd.f32 %v581, %v725
        %v825 = vadd.f32 %v582, %v727
        %v826 = vadd.f32 %v583, %v808
        %v827 = vadd.f32 %v584, %v810
        %v828 = vadd.f32 %v585, %v731
        %v829 = vadd.f32 %v586, %v733
        %v830 = vadd.f32 %v587, %v814
        %v831 = vadd.f32 %v588, %v816
        %v832 = vadd.f32 %v589, %v737
        %v833 = vadd.f32 %v590, %v739
        %v834 = vadd.f32 %v591, %v820
        %v835 = vadd.f32 %v592, %v822
        %836 = vst [vmem:[#allocation2] sm:$0xff] %v824
        %837 = vst [vmem:[#allocation2 + $0x8] sm:$0xff] %v825
        %838 = vst [vmem:[#allocation2 + $0x10] sm:$0xff] %v826
        %839 = vst [vmem:[#allocation2 + $0x18] sm:$0xff] %v827
        %840 = vst [vmem:[#allocation2 + $0x20] sm:$0xff] %v828
        %841 = vst [vmem:[#allocation2 + $0x28] sm:$0xff] %v829
        %842 = vst [vmem:[#allocation2 + $0x30] sm:$0xff] %v830
        %843 = vst [vmem:[#allocation2 + $0x38] sm:$0xff] %v831
        %844 = vst [vmem:[#allocation2 + $0x40] sm:$0x7f] %v832
        %845 = vst [vmem:[#allocation2 + $0x48] sm:$0x7f] %v833
        %846 = vst [vmem:[#allocation2 + $0x50] sm:$0x7f] %v834
        %847 = vst [vmem:[#allocation2 + $0x58] sm:$0x7f] %v835
        %v848 = vld [vmem:[#allocation2] sm:$0xff]
        %v849 = vld [vmem:[#allocation2 + $0x8] sm:$0xff]
        %v850 = vld [vmem:[#allocation2 + $0x10] sm:$0xff]
        %v851 = vld [vmem:[#allocation2 + $0x18] sm:$0xff]
        %v852 = vld [vmem:[#allocation2 + $0x20] sm:$0xff]
        %v853 = vld [vmem:[#allocation2 + $0x28] sm:$0xff]
        %v854 = vld [vmem:[#allocation2 + $0x30] sm:$0xff]
        %v855 = vld [vmem:[#allocation2 + $0x38] sm:$0xff]
        %v856 = vld [vmem:[#allocation2 + $0x40] sm:$0x3f]
        %v857 = vld [vmem:[#allocation2 + $0x48] sm:$0x3f]
        %v858 = vld [vmem:[#allocation2 + $0x50] sm:$0x3f]
        %v859 = vld [vmem:[#allocation2 + $0x58] sm:$0x3f]
        %v860 = vld [vmem:[%s282 + $0x2] sm:$0xff]
        %v861 = vld [vmem:[%s282 + $0xa] sm:$0xff]
        %v862 = vld [vmem:[%s282 + $0x12] sm:$0x3f]
        %s863 = scalar_lea.vmem [#allocation6], 640
        %v864 = vld [vmem:[%s863] sm:$0xff]
        %v865 = vld [vmem:[%s863 + $0x8] sm:$0xff]
        %v866 = vld [vmem:[%s863 + $0x10] sm:$0xff]
        %v867 = vld [vmem:[%s863 + $0x18] sm:$0xff]
        %v868 = vld [vmem:[%s863 + $0x20] sm:$0xff]
        %v869 = vld [vmem:[%s863 + $0x28] sm:$0xff]
        %v870 = vld [vmem:[%s863 + $0x30] sm:$0xff]
        %v871 = vld [vmem:[%s863 + $0x38] sm:$0xff]
        %v872 = vld [vmem:[%s863 + $0x40] sm:$0xff]
        %v873 = vld [vmem:[%s863 + $0x48] sm:$0xff]
        %v874 = vld [vmem:[%s863 + $0x50] sm:$0xff]
        %v875 = vld [vmem:[%s863 + $0x58] sm:$0xff]
        %v876 = vld [vmem:[%s863 + $0x60] sm:$0xff]
        %v877 = vld [vmem:[%s863 + $0x68] sm:$0xff]
        %v878 = vld [vmem:[%s863 + $0x70] sm:$0xff]
        %v879 = vld [vmem:[%s863 + $0x78] sm:$0xff]
        %v880 = vld [vmem:[%s863 + $0x80] sm:$0xff]
        %v881 = vld [vmem:[%s863 + $0x88] sm:$0xff]
        %v882 = vld [vmem:[%s863 + $0x90] sm:$0xff]
        %v883 = vld [vmem:[%s863 + $0x98] sm:$0xff]
        %v884 = vld [vmem:[%s863 + $0xa0] sm:$0xff]
        %v885 = vld [vmem:[%s863 + $0xa8] sm:$0xff]
        %v886 = vld [vmem:[%s863 + $0xb0] sm:$0xff]
        %v887 = vld [vmem:[%s863 + $0xb8] sm:$0xff]
        %v888 = vld [vmem:[%s863 + $0xc0] sm:$0xff]
        %v889 = vld [vmem:[%s863 + $0xc8] sm:$0xff]
        %v890 = vld [vmem:[%s863 + $0xd0] sm:$0xff]
        %v891 = vld [vmem:[%s863 + $0xd8] sm:$0xff]
        %v892 = vld [vmem:[%s863 + $0xe0] sm:$0xff]
        %v893 = vld [vmem:[%s863 + $0xe8] sm:$0xff]
        %v894 = vld [vmem:[%s863 + $0xf0] sm:$0xff]
        %v895 = vld [vmem:[%s863 + $0xf8] sm:$0xff]
        %v896 = vld [vmem:[%s863 + $0x100] sm:$0xff]
        %v897 = vld [vmem:[%s863 + $0x108] sm:$0xff]
        %v898 = vld [vmem:[%s863 + $0x110] sm:$0xff]
        %v899 = vld [vmem:[%s863 + $0x118] sm:$0xff]
        %v900 = vld [vmem:[%s863 + $0x120] sm:$0x3]
        %v901 = vld [vmem:[%s863 + $0x128] sm:$0x3]
        %v902 = vld [vmem:[%s863 + $0x130] sm:$0x3]
        %v903 = vld [vmem:[%s863 + $0x138] sm:$0x3]
        %v905 = vsel %vm380, %v860, 0
        %v908 = vsel %vm380, %v861, 0
        %v911 = vsel %vm380, %v862, 0
        %v914 = vsel %vm390, %v900, 0
        %v917 = vsel %vm390, %v901, 0
        %v920 = vsel %vm390, %v902, 0
        %v923 = vsel %vm390, %v903, 0
        %925 = vmatprep.subr.mxu0 %v865
        %926 = vmatpush1.msra.mxu0 %v864
        %927 = vmatprep.subr.mxu0 %v869
        %928 = vmatpush1.msra.mxu0 %v868
        %929 = vmatprep.subr.mxu0 %v873
        %930 = vmatpush1.msra.mxu0 %v872
        %931 = vmatprep.subr.mxu0 %v877
        %932 = vmatpush1.msra.mxu0 %v876
        %933 = vmatprep.subr.mxu0 %v881
        %934 = vmatpush1.msra.mxu0 %v880
        %935 = vmatprep.subr.mxu0 %v885
        %936 = vmatpush1.msra.mxu0 %v884
        %937 = vmatprep.subr.mxu0 %v889
        %938 = vmatpush1.msra.mxu0 %v888
        %939 = vmatprep.subr.mxu0 %v893
        %940 = vmatpush1.msra.mxu0 %v892
        %941 = vmatprep.subr.mxu0 %v897
        %942 = vmatpush1.msra.mxu0 %v896
        %943 = vmatprep.subr.mxu0 %v917
        %944 = vmatpush1.msra.mxu0 %v914
        %945 = vmatprep.subr.mxu0 0.0
        %946 = vmatpush1.msra.mxu0 0.0
        %947 = vmatprep.subr.mxu0 0.0
        %948 = vmatpush1.msra.mxu0 0.0
        %949 = vmatprep.subr.mxu0 0.0
        %950 = vmatpush1.msra.mxu0 0.0
        %951 = vmatprep.subr.mxu0 0.0
        %952 = vmatpush1.msra.mxu0 0.0
        %953 = vmatprep.subr.mxu0 0.0
        %954 = vmatpush1.msra.mxu0 0.0
        %955 = vmatprep.subr.mxu0 0.0
        %956 = vmatpush1.msra.mxu0 0.0
        %957 = vmatprep.subr.mxu0 0.0
        %958 = vmatpush1.msra.mxu0 0.0
        %959 = vmatprep.subr.mxu0 0.0
        %960 = vmatpush1.msra.mxu0 0.0
        %961 = vmatprep.subr.mxu0 0.0
        %962 = vmatpush1.msra.mxu0 0.0
        %963 = vmatprep.subr.mxu0 0.0
        %964 = vmatpush1.msra.mxu0 0.0
        %965 = vmatprep.subr.mxu0 0.0
        %966 = vmatpush1.msra.mxu0 0.0
        %967 = vmatprep.subr.mxu0 0.0
        %968 = vmatpush1.msra.mxu0 0.0
        %969 = vmatprep.subr.mxu0 0.0
        %970 = vmatpush1.msra.mxu0 0.0
        %971 = vmatprep.subr.mxu0 0.0
        %972 = vmatpush1.msra.mxu0 0.0
        %973 = vmatprep.subr.mxu0 0.0
        %974 = vmatpush1.msra.mxu0 0.0
        %975 = vmatprep.subr.mxu0 0.0
        %976 = vmatpush1.msra.mxu0 0.0
        %977 = vmatprep.subr.mxu0 0.0
        %978 = vmatpush1.msra.mxu0 0.0
        %979 = vmatprep.subr.mxu0 0.0
        %980 = vmatpush1.msra.mxu0 0.0
        %981 = vmatprep.subr.mxu0 0.0
        %982 = vmatpush1.msra.mxu0 0.0
        %983 = vmatprep.subr.mxu0 0.0
        %984 = vmatpush1.msra.mxu0 0.0
        %985 = vmatprep.subr.mxu0 0.0
        %986 = vmatpush1.msra.mxu0 0.0
        %987 = vmatprep.subr.mxu0 0.0
        %988 = vmatpush1.msra.mxu0 0.0
        %989 = vmatprep.mubr.f32.mxu0 0.0
        %990 = vmatmul.mubr.f32.gmra.mrb[0].mxu0 %v905
        %v991 = vpop.f32.mrb[0].mxu0
        %v992 = vadd.f32 0.0, %v991
        %v993 = vpop.f32.mrb[0].mxu0
        %v994 = vadd.f32 0.0, %v993
        %995 = vmatprep.mubr.f32.mxu0 0.0
        %996 = vmatmul.mubr.f32.gmra.mrb[0].mxu0 %v908
        %v997 = vpop.f32.mrb[0].mxu0
        %v998 = vadd.f32 0.0, %v997
        %v999 = vpop.f32.mrb[0].mxu0
        %v1000 = vadd.f32 0.0, %v999
        %1001 = vmatprep.mubr.f32.mxu0 0.0
        %1002 = vmatmul.mubr.f32.gmra.mrb[0].mxu0 %v911
        %v1003 = vpop.f32.mrb[0].mxu0
        %v1004 = vadd.f32 0.0, %v1003
        %v1005 = vpop.f32.mrb[0].mxu0
        %v1006 = vadd.f32 0.0, %v1005
        %1007 = vdwg.mxu0
        %1008 = vmatprep.subr.mxu0 %v867
        %1009 = vmatpush1.msra.mxu0 %v866
        %1010 = vmatprep.subr.mxu0 %v871
        %1011 = vmatpush1.msra.mxu0 %v870
        %1012 = vmatprep.subr.mxu0 %v875
        %1013 = vmatpush1.msra.mxu0 %v874
        %1014 = vmatprep.subr.mxu0 %v879
        %1015 = vmatpush1.msra.mxu0 %v878
        %1016 = vmatprep.subr.mxu0 %v883
        %1017 = vmatpush1.msra.mxu0 %v882
        %1018 = vmatprep.subr.mxu0 %v887
        %1019 = vmatpush1.msra.mxu0 %v886
        %1020 = vmatprep.subr.mxu0 %v891
        %1021 = vmatpush1.msra.mxu0 %v890
        %1022 = vmatprep.subr.mxu0 %v895
        %1023 = vmatpush1.msra.mxu0 %v894
        %1024 = vmatprep.subr.mxu0 %v899
        %1025 = vmatpush1.msra.mxu0 %v898
        %1026 = vmatprep.subr.mxu0 %v923
        %1027 = vmatpush1.msra.mxu0 %v920
        %1028 = vmatprep.subr.mxu0 0.0
        %1029 = vmatpush1.msra.mxu0 0.0
        %1030 = vmatprep.subr.mxu0 0.0
        %1031 = vmatpush1.msra.mxu0 0.0
        %1032 = vmatprep.subr.mxu0 0.0
        %1033 = vmatpush1.msra.mxu0 0.0
        %1034 = vmatprep.subr.mxu0 0.0
        %1035 = vmatpush1.msra.mxu0 0.0
        %1036 = vmatprep.subr.mxu0 0.0
        %1037 = vmatpush1.msra.mxu0 0.0
        %1038 = vmatprep.subr.mxu0 0.0
        %1039 = vmatpush1.msra.mxu0 0.0
        %1040 = vmatprep.subr.mxu0 0.0
        %1041 = vmatpush1.msra.mxu0 0.0
        %1042 = vmatprep.subr.mxu0 0.0
        %1043 = vmatpush1.msra.mxu0 0.0
        %1044 = vmatprep.subr.mxu0 0.0
        %1045 = vmatpush1.msra.mxu0 0.0
        %1046 = vmatprep.subr.mxu0 0.0
        %1047 = vmatpush1.msra.mxu0 0.0
        %1048 = vmatprep.subr.mxu0 0.0
        %1049 = vmatpush1.msra.mxu0 0.0
        %1050 = vmatprep.subr.mxu0 0.0
        %1051 = vmatpush1.msra.mxu0 0.0
        %1052 = vmatprep.subr.mxu0 0.0
        %1053 = vmatpush1.msra.mxu0 0.0
        %1054 = vmatprep.subr.mxu0 0.0
        %1055 = vmatpush1.msra.mxu0 0.0
        %1056 = vmatprep.subr.mxu0 0.0
        %1057 = vmatpush1.msra.mxu0 0.0
        %1058 = vmatprep.subr.mxu0 0.0
        %1059 = vmatpush1.msra.mxu0 0.0
        %1060 = vmatprep.subr.mxu0 0.0
        %1061 = vmatpush1.msra.mxu0 0.0
        %1062 = vmatprep.subr.mxu0 0.0
        %1063 = vmatpush1.msra.mxu0 0.0
        %1064 = vmatprep.subr.mxu0 0.0
        %1065 = vmatpush1.msra.mxu0 0.0
        %1066 = vmatprep.subr.mxu0 0.0
        %1067 = vmatpush1.msra.mxu0 0.0
        %1068 = vmatprep.subr.mxu0 0.0
        %1069 = vmatpush1.msra.mxu0 0.0
        %1070 = vmatprep.subr.mxu0 0.0
        %1071 = vmatpush1.msra.mxu0 0.0
        %1072 = vmatprep.mubr.f32.mxu0 0.0
        %1073 = vmatmul.mubr.f32.gmra.mrb[0].mxu0 %v905
        %v1074 = vpop.f32.mrb[0].mxu0
        %v1075 = vadd.f32 0.0, %v1074
        %v1076 = vpop.f32.mrb[0].mxu0
        %v1077 = vadd.f32 0.0, %v1076
        %1078 = vmatprep.mubr.f32.mxu0 0.0
        %1079 = vmatmul.mubr.f32.gmra.mrb[0].mxu0 %v908
        %v1080 = vpop.f32.mrb[0].mxu0
        %v1081 = vadd.f32 0.0, %v1080
        %v1082 = vpop.f32.mrb[0].mxu0
        %v1083 = vadd.f32 0.0, %v1082
        %1084 = vmatprep.mubr.f32.mxu0 0.0
        %1085 = vmatmul.mubr.f32.gmra.mrb[0].mxu0 %v911
        %v1086 = vpop.f32.mrb[0].mxu0
        %v1087 = vadd.f32 0.0, %v1086
        %v1088 = vpop.f32.mrb[0].mxu0
        %v1089 = vadd.f32 0.0, %v1088
        %1090 = vdwg.mxu0
        %v1091 = vadd.f32 %v848, %v992
        %v1092 = vadd.f32 %v849, %v994
        %v1093 = vadd.f32 %v850, %v1075
        %v1094 = vadd.f32 %v851, %v1077
        %v1095 = vadd.f32 %v852, %v998
        %v1096 = vadd.f32 %v853, %v1000
        %v1097 = vadd.f32 %v854, %v1081
        %v1098 = vadd.f32 %v855, %v1083
        %v1099 = vadd.f32 %v856, %v1004
        %v1100 = vadd.f32 %v857, %v1006
        %v1101 = vadd.f32 %v858, %v1087
        %v1102 = vadd.f32 %v859, %v1089
        %1103 = vst [vmem:[#allocation2] sm:$0xff] %v1091
        %1104 = vst [vmem:[#allocation2 + $0x8] sm:$0xff] %v1092
        %1105 = vst [vmem:[#allocation2 + $0x10] sm:$0xff] %v1093
        %1106 = vst [vmem:[#allocation2 + $0x18] sm:$0xff] %v1094
        %1107 = vst [vmem:[#allocation2 + $0x20] sm:$0xff] %v1095
        %1108 = vst [vmem:[#allocation2 + $0x28] sm:$0xff] %v1096
        %1109 = vst [vmem:[#allocation2 + $0x30] sm:$0xff] %v1097
        %1110 = vst [vmem:[#allocation2 + $0x38] sm:$0xff] %v1098
        %1111 = vst [vmem:[#allocation2 + $0x40] sm:$0x3f] %v1099
        %1112 = vst [vmem:[#allocation2 + $0x48] sm:$0x3f] %v1100
        %1113 = vst [vmem:[#allocation2 + $0x50] sm:$0x3f] %v1101
        %1114 = vst [vmem:[#allocation2 + $0x58] sm:$0x3f] %v1102
        %v1115 = vld [vmem:[#allocation2] sm:$0xff]
        %v1116 = vld [vmem:[#allocation2 + $0x8] sm:$0xff]
        %v1117 = vld [vmem:[#allocation2 + $0x10] sm:$0xff]
        %v1118 = vld [vmem:[#allocation2 + $0x18] sm:$0xff]
        %v1119 = vld [vmem:[#allocation2 + $0x20] sm:$0xff]
        %v1120 = vld [vmem:[#allocation2 + $0x28] sm:$0xff]
        %v1121 = vld [vmem:[#allocation2 + $0x30] sm:$0xff]
        %v1122 = vld [vmem:[#allocation2 + $0x38] sm:$0xff]
        %v1123 = vld [vmem:[#allocation2 + $0x40] sm:$0x1f]
        %v1124 = vld [vmem:[#allocation2 + $0x48] sm:$0x1f]
        %v1125 = vld [vmem:[#allocation2 + $0x50] sm:$0x1f]
        %v1126 = vld [vmem:[#allocation2 + $0x58] sm:$0x1f]
        %v1127 = vld [vmem:[%s282 + $0x3] sm:$0xff]
        %v1128 = vld [vmem:[%s282 + $0xb] sm:$0xff]
        %v1129 = vld [vmem:[%s282 + $0x13] sm:$0x1f]
        %s1130 = scalar_lea.vmem [#allocation6], 960
        %v1131 = vld [vmem:[%s1130] sm:$0xff]
        %v1132 = vld [vmem:[%s1130 + $0x8] sm:$0xff]
        %v1133 = vld [vmem:[%s1130 + $0x10] sm:$0xff]
        %v1134 = vld [vmem:[%s1130 + $0x18] sm:$0xff]
        %v1135 = vld [vmem:[%s1130 + $0x20] sm:$0xff]
        %v1136 = vld [vmem:[%s1130 + $0x28] sm:$0xff]
        %v1137 = vld [vmem:[%s1130 + $0x30] sm:$0xff]
        %v1138 = vld [vmem:[%s1130 + $0x38] sm:$0xff]
        %v1139 = vld [vmem:[%s1130 + $0x40] sm:$0xff]
        %v1140 = vld [vmem:[%s1130 + $0x48] sm:$0xff]
        %v1141 = vld [vmem:[%s1130 + $0x50] sm:$0xff]
        %v1142 = vld [vmem:[%s1130 + $0x58] sm:$0xff]
        %v1143 = vld [vmem:[%s1130 + $0x60] sm:$0xff]
        %v1144 = vld [vmem:[%s1130 + $0x68] sm:$0xff]
        %v1145 = vld [vmem:[%s1130 + $0x70] sm:$0xff]
        %v1146 = vld [vmem:[%s1130 + $0x78] sm:$0xff]
        %v1147 = vld [vmem:[%s1130 + $0x80] sm:$0xff]
        %v1148 = vld [vmem:[%s1130 + $0x88] sm:$0xff]
        %v1149 = vld [vmem:[%s1130 + $0x90] sm:$0xff]
        %v1150 = vld [vmem:[%s1130 + $0x98] sm:$0xff]
        %v1151 = vld [vmem:[%s1130 + $0xa0] sm:$0xff]
        %v1152 = vld [vmem:[%s1130 + $0xa8] sm:$0xff]
        %v1153 = vld [vmem:[%s1130 + $0xb0] sm:$0xff]
        %v1154 = vld [vmem:[%s1130 + $0xb8] sm:$0xff]
        %v1155 = vld [vmem:[%s1130 + $0xc0] sm:$0xff]
        %v1156 = vld [vmem:[%s1130 + $0xc8] sm:$0xff]
        %v1157 = vld [vmem:[%s1130 + $0xd0] sm:$0xff]
        %v1158 = vld [vmem:[%s1130 + $0xd8] sm:$0xff]
        %v1159 = vld [vmem:[%s1130 + $0xe0] sm:$0xff]
        %v1160 = vld [vmem:[%s1130 + $0xe8] sm:$0xff]
        %v1161 = vld [vmem:[%s1130 + $0xf0] sm:$0xff]
        %v1162 = vld [vmem:[%s1130 + $0xf8] sm:$0xff]
        %v1163 = vld [vmem:[%s1130 + $0x100] sm:$0xff]
        %v1164 = vld [vmem:[%s1130 + $0x108] sm:$0xff]
        %v1165 = vld [vmem:[%s1130 + $0x110] sm:$0xff]
        %v1166 = vld [vmem:[%s1130 + $0x118] sm:$0xff]
        %v1167 = vld [vmem:[%s1130 + $0x120] sm:$0x3]
        %v1168 = vld [vmem:[%s1130 + $0x128] sm:$0x3]
        %v1169 = vld [vmem:[%s1130 + $0x130] sm:$0x3]
        %v1170 = vld [vmem:[%s1130 + $0x138] sm:$0x3]
        %v1172 = vsel %vm380, %v1127, 0
        %v1175 = vsel %vm380, %v1128, 0
        %v1178 = vsel %vm380, %v1129, 0
        %v1181 = vsel %vm390, %v1167, 0
        %v1184 = vsel %vm390, %v1168, 0
        %v1187 = vsel %vm390, %v1169, 0
        %v1190 = vsel %vm390, %v1170, 0
        %1192 = vmatprep.subr.mxu0 %v1132
        %1193 = vmatpush1.msra.mxu0 %v1131
        %1194 = vmatprep.subr.mxu0 %v1136
        %1195 = vmatpush1.msra.mxu0 %v1135
        %1196 = vmatprep.subr.mxu0 %v1140
        %1197 = vmatpush1.msra.mxu0 %v1139
        %1198 = vmatprep.subr.mxu0 %v1144
        %1199 = vmatpush1.msra.mxu0 %v1143
        %1200 = vmatprep.subr.mxu0 %v1148
        %1201 = vmatpush1.msra.mxu0 %v1147
        %1202 = vmatprep.subr.mxu0 %v1152
        %1203 = vmatpush1.msra.mxu0 %v1151
        %1204 = vmatprep.subr.mxu0 %v1156
        %1205 = vmatpush1.msra.mxu0 %v1155
        %1206 = vmatprep.subr.mxu0 %v1160
        %1207 = vmatpush1.msra.mxu0 %v1159
        %1208 = vmatprep.subr.mxu0 %v1164
        %1209 = vmatpush1.msra.mxu0 %v1163
        %1210 = vmatprep.subr.mxu0 %v1184
        %1211 = vmatpush1.msra.mxu0 %v1181
        %1212 = vmatprep.subr.mxu0 0.0
        %1213 = vmatpush1.msra.mxu0 0.0
        %1214 = vmatprep.subr.mxu0 0.0
        %1215 = vmatpush1.msra.mxu0 0.0
        %1216 = vmatprep.subr.mxu0 0.0
        %1217 = vmatpush1.msra.mxu0 0.0
        %1218 = vmatprep.subr.mxu0 0.0
        %1219 = vmatpush1.msra.mxu0 0.0
        %1220 = vmatprep.subr.mxu0 0.0
        %1221 = vmatpush1.msra.mxu0 0.0
        %1222 = vmatprep.subr.mxu0 0.0
        %1223 = vmatpush1.msra.mxu0 0.0
        %1224 = vmatprep.subr.mxu0 0.0
        %1225 = vmatpush1.msra.mxu0 0.0
        %1226 = vmatprep.subr.mxu0 0.0
        %1227 = vmatpush1.msra.mxu0 0.0
        %1228 = vmatprep.subr.mxu0 0.0
        %1229 = vmatpush1.msra.mxu0 0.0
        %1230 = vmatprep.subr.mxu0 0.0
        %1231 = vmatpush1.msra.mxu0 0.0
        %1232 = vmatprep.subr.mxu0 0.0
        %1233 = vmatpush1.msra.mxu0 0.0
        %1234 = vmatprep.subr.mxu0 0.0
        %1235 = vmatpush1.msra.mxu0 0.0
        %1236 = vmatprep.subr.mxu0 0.0
        %1237 = vmatpush1.msra.mxu0 0.0
        %1238 = vmatprep.subr.mxu0 0.0
        %1239 = vmatpush1.msra.mxu0 0.0
        %1240 = vmatprep.subr.mxu0 0.0
        %1241 = vmatpush1.msra.mxu0 0.0
        %1242 = vmatprep.subr.mxu0 0.0
        %1243 = vmatpush1.msra.mxu0 0.0
        %1244 = vmatprep.subr.mxu0 0.0
        %1245 = vmatpush1.msra.mxu0 0.0
        %1246 = vmatprep.subr.mxu0 0.0
        %1247 = vmatpush1.msra.mxu0 0.0
        %1248 = vmatprep.subr.mxu0 0.0
        %1249 = vmatpush1.msra.mxu0 0.0
        %1250 = vmatprep.subr.mxu0 0.0
        %1251 = vmatpush1.msra.mxu0 0.0
        %1252 = vmatprep.subr.mxu0 0.0
        %1253 = vmatpush1.msra.mxu0 0.0
        %1254 = vmatprep.subr.mxu0 0.0
        %1255 = vmatpush1.msra.mxu0 0.0
        %1256 = vmatprep.mubr.f32.mxu0 0.0
        %1257 = vmatmul.mubr.f32.gmra.mrb[0].mxu0 %v1172
        %v1258 = vpop.f32.mrb[0].mxu0
        %v1259 = vadd.f32 0.0, %v1258
        %v1260 = vpop.f32.mrb[0].mxu0
        %v1261 = vadd.f32 0.0, %v1260
        %1262 = vmatprep.mubr.f32.mxu0 0.0
        %1263 = vmatmul.mubr.f32.gmra.mrb[0].mxu0 %v1175
        %v1264 = vpop.f32.mrb[0].mxu0
        %v1265 = vadd.f32 0.0, %v1264
        %v1266 = vpop.f32.mrb[0].mxu0
        %v1267 = vadd.f32 0.0, %v1266
        %1268 = vmatprep.mubr.f32.mxu0 0.0
        %1269 = vmatmul.mubr.f32.gmra.mrb[0].mxu0 %v1178
        %v1270 = vpop.f32.mrb[0].mxu0
        %v1271 = vadd.f32 0.0, %v1270
        %v1272 = vpop.f32.mrb[0].mxu0
        %v1273 = vadd.f32 0.0, %v1272
        %1274 = vdwg.mxu0
        %1275 = vmatprep.subr.mxu0 %v1134
        %1276 = vmatpush1.msra.mxu0 %v1133
        %1277 = vmatprep.subr.mxu0 %v1138
        %1278 = vmatpush1.msra.mxu0 %v1137
        %1279 = vmatprep.subr.mxu0 %v1142
        %1280 = vmatpush1.msra.mxu0 %v1141
        %1281 = vmatprep.subr.mxu0 %v1146
        %1282 = vmatpush1.msra.mxu0 %v1145
        %1283 = vmatprep.subr.mxu0 %v1150
        %1284 = vmatpush1.msra.mxu0 %v1149
        %1285 = vmatprep.subr.mxu0 %v1154
        %1286 = vmatpush1.msra.mxu0 %v1153
        %1287 = vmatprep.subr.mxu0 %v1158
        %1288 = vmatpush1.msra.mxu0 %v1157
        %1289 = vmatprep.subr.mxu0 %v1162
        %1290 = vmatpush1.msra.mxu0 %v1161
        %1291 = vmatprep.subr.mxu0 %v1166
        %1292 = vmatpush1.msra.mxu0 %v1165
        %1293 = vmatprep.subr.mxu0 %v1190
        %1294 = vmatpush1.msra.mxu0 %v1187
        %1295 = vmatprep.subr.mxu0 0.0
        %1296 = vmatpush1.msra.mxu0 0.0
        %1297 = vmatprep.subr.mxu0 0.0
        %1298 = vmatpush1.msra.mxu0 0.0
        %1299 = vmatprep.subr.mxu0 0.0
        %1300 = vmatpush1.msra.mxu0 0.0
        %1301 = vmatprep.subr.mxu0 0.0
        %1302 = vmatpush1.msra.mxu0 0.0
        %1303 = vmatprep.subr.mxu0 0.0
        %1304 = vmatpush1.msra.mxu0 0.0
        %1305 = vmatprep.subr.mxu0 0.0
        %1306 = vmatpush1.msra.mxu0 0.0
        %1307 = vmatprep.subr.mxu0 0.0
        %1308 = vmatpush1.msra.mxu0 0.0
        %1309 = vmatprep.subr.mxu0 0.0
        %1310 = vmatpush1.msra.mxu0 0.0
        %1311 = vmatprep.subr.mxu0 0.0
        %1312 = vmatpush1.msra.mxu0 0.0
        %1313 = vmatprep.subr.mxu0 0.0
        %1314 = vmatpush1.msra.mxu0 0.0
        %1315 = vmatprep.subr.mxu0 0.0
        %1316 = vmatpush1.msra.mxu0 0.0
        %1317 = vmatprep.subr.mxu0 0.0
        %1318 = vmatpush1.msra.mxu0 0.0
        %1319 = vmatprep.subr.mxu0 0.0
        %1320 = vmatpush1.msra.mxu0 0.0
        %1321 = vmatprep.subr.mxu0 0.0
        %1322 = vmatpush1.msra.mxu0 0.0
        %1323 = vmatprep.subr.mxu0 0.0
        %1324 = vmatpush1.msra.mxu0 0.0
        %1325 = vmatprep.subr.mxu0 0.0
        %1326 = vmatpush1.msra.mxu0 0.0
        %1327 = vmatprep.subr.mxu0 0.0
        %1328 = vmatpush1.msra.mxu0 0.0
        %1329 = vmatprep.subr.mxu0 0.0
        %1330 = vmatpush1.msra.mxu0 0.0
        %1331 = vmatprep.subr.mxu0 0.0
        %1332 = vmatpush1.msra.mxu0 0.0
        %1333 = vmatprep.subr.mxu0 0.0
        %1334 = vmatpush1.msra.mxu0 0.0
        %1335 = vmatprep.subr.mxu0 0.0
        %1336 = vmatpush1.msra.mxu0 0.0
        %1337 = vmatprep.subr.mxu0 0.0
        %1338 = vmatpush1.msra.mxu0 0.0
        %1339 = vmatprep.mubr.f32.mxu0 0.0
        %1340 = vmatmul.mubr.f32.gmra.mrb[0].mxu0 %v1172
        %v1341 = vpop.f32.mrb[0].mxu0
        %v1342 = vadd.f32 0.0, %v1341
        %v1343 = vpop.f32.mrb[0].mxu0
        %v1344 = vadd.f32 0.0, %v1343
        %1345 = vmatprep.mubr.f32.mxu0 0.0
        %1346 = vmatmul.mubr.f32.gmra.mrb[0].mxu0 %v1175
        %v1347 = vpop.f32.mrb[0].mxu0
        %v1348 = vadd.f32 0.0, %v1347
        %v1349 = vpop.f32.mrb[0].mxu0
        %v1350 = vadd.f32 0.0, %v1349
        %1351 = vmatprep.mubr.f32.mxu0 0.0
        %1352 = vmatmul.mubr.f32.gmra.mrb[0].mxu0 %v1178
        %v1353 = vpop.f32.mrb[0].mxu0
        %v1354 = vadd.f32 0.0, %v1353
        %v1355 = vpop.f32.mrb[0].mxu0
        %v1356 = vadd.f32 0.0, %v1355
        %1357 = vdwg.mxu0
        %v1358 = vadd.f32 %v1115, %v1259
        %v1359 = vadd.f32 %v1116, %v1261
        %v1360 = vadd.f32 %v1117, %v1342
        %v1361 = vadd.f32 %v1118, %v1344
        %v1362 = vadd.f32 %v1119, %v1265
        %v1363 = vadd.f32 %v1120, %v1267
        %v1364 = vadd.f32 %v1121, %v1348
        %v1365 = vadd.f32 %v1122, %v1350
        %v1366 = vadd.f32 %v1123, %v1271
        %v1367 = vadd.f32 %v1124, %v1273
        %v1368 = vadd.f32 %v1125, %v1354
        %v1369 = vadd.f32 %v1126, %v1356
        %1370 = vst [vmem:[#allocation2] sm:$0xff] %v1358
        %1371 = vst [vmem:[#allocation2 + $0x8] sm:$0xff] %v1359
        %1372 = vst [vmem:[#allocation2 + $0x10] sm:$0xff] %v1360
        %1373 = vst [vmem:[#allocation2 + $0x18] sm:$0xff] %v1361
        %1374 = vst [vmem:[#allocation2 + $0x20] sm:$0xff] %v1362
        %1375 = vst [vmem:[#allocation2 + $0x28] sm:$0xff] %v1363
        %1376 = vst [vmem:[#allocation2 + $0x30] sm:$0xff] %v1364
        %1377 = vst [vmem:[#allocation2 + $0x38] sm:$0xff] %v1365
        %1378 = vst [vmem:[#allocation2 + $0x40] sm:$0x1f] %v1366
        %1379 = vst [vmem:[#allocation2 + $0x48] sm:$0x1f] %v1367
        %1380 = vst [vmem:[#allocation2 + $0x50] sm:$0x1f] %v1368
        %1381 = vst [vmem:[#allocation2 + $0x58] sm:$0x1f] %v1369
        %v1382 = vld [vmem:[#allocation2] sm:$0xff]
        %v1383 = vld [vmem:[#allocation2 + $0x8] sm:$0xff]
        %v1384 = vld [vmem:[#allocation2 + $0x10] sm:$0xff]
        %v1385 = vld [vmem:[#allocation2 + $0x18] sm:$0xff]
        %v1386 = vld [vmem:[#allocation2 + $0x20] sm:$0xff]
        %v1387 = vld [vmem:[#allocation2 + $0x28] sm:$0xff]
        %v1388 = vld [vmem:[#allocation2 + $0x30] sm:$0xff]
        %v1389 = vld [vmem:[#allocation2 + $0x38] sm:$0xff]
        %v1390 = vld [vmem:[#allocation2 + $0x40] sm:$0xf]
        %v1391 = vld [vmem:[#allocation2 + $0x48] sm:$0xf]
        %v1392 = vld [vmem:[#allocation2 + $0x50] sm:$0xf]
        %v1393 = vld [vmem:[#allocation2 + $0x58] sm:$0xf]
        %v1394 = vld [vmem:[%s282 + $0x4] sm:$0xff]
        %v1395 = vld [vmem:[%s282 + $0xc] sm:$0xff]
        %v1396 = vld [vmem:[%s282 + $0x14] sm:$0xf]
        %s1397 = scalar_lea.vmem [#allocation6], 1280
        %v1398 = vld [vmem:[%s1397] sm:$0xff]
        %v1399 = vld [vmem:[%s1397 + $0x8] sm:$0xff]
        %v1400 = vld [vmem:[%s1397 + $0x10] sm:$0xff]
        %v1401 = vld [vmem:[%s1397 + $0x18] sm:$0xff]
        %v1402 = vld [vmem:[%s1397 + $0x20] sm:$0xff]
        %v1403 = vld [vmem:[%s1397 + $0x28] sm:$0xff]
        %v1404 = vld [vmem:[%s1397 + $0x30] sm:$0xff]
        %v1405 = vld [vmem:[%s1397 + $0x38] sm:$0xff]
        %v1406 = vld [vmem:[%s1397 + $0x40] sm:$0xff]
        %v1407 = vld [vmem:[%s1397 + $0x48] sm:$0xff]
        %v1408 = vld [vmem:[%s1397 + $0x50] sm:$0xff]
        %v1409 = vld [vmem:[%s1397 + $0x58] sm:$0xff]
        %v1410 = vld [vmem:[%s1397 + $0x60] sm:$0xff]
        %v1411 = vld [vmem:[%s1397 + $0x68] sm:$0xff]
        %v1412 = vld [vmem:[%s1397 + $0x70] sm:$0xff]
        %v1413 = vld [vmem:[%s1397 + $0x78] sm:$0xff]
        %v1414 = vld [vmem:[%s1397 + $0x80] sm:$0xff]
        %v1415 = vld [vmem:[%s1397 + $0x88] sm:$0xff]
        %v1416 = vld [vmem:[%s1397 + $0x90] sm:$0xff]
        %v1417 = vld [vmem:[%s1397 + $0x98] sm:$0xff]
        %v1418 = vld [vmem:[%s1397 + $0xa0] sm:$0xff]
        %v1419 = vld [vmem:[%s1397 + $0xa8] sm:$0xff]
        %v1420 = vld [vmem:[%s1397 + $0xb0] sm:$0xff]
        %v1421 = vld [vmem:[%s1397 + $0xb8] sm:$0xff]
        %v1422 = vld [vmem:[%s1397 + $0xc0] sm:$0xff]
        %v1423 = vld [vmem:[%s1397 + $0xc8] sm:$0xff]
        %v1424 = vld [vmem:[%s1397 + $0xd0] sm:$0xff]
        %v1425 = vld [vmem:[%s1397 + $0xd8] sm:$0xff]
        %v1426 = vld [vmem:[%s1397 + $0xe0] sm:$0xff]
        %v1427 = vld [vmem:[%s1397 + $0xe8] sm:$0xff]
        %v1428 = vld [vmem:[%s1397 + $0xf0] sm:$0xff]
        %v1429 = vld [vmem:[%s1397 + $0xf8] sm:$0xff]
        %v1430 = vld [vmem:[%s1397 + $0x100] sm:$0xff]
        %v1431 = vld [vmem:[%s1397 + $0x108] sm:$0xff]
        %v1432 = vld [vmem:[%s1397 + $0x110] sm:$0xff]
        %v1433 = vld [vmem:[%s1397 + $0x118] sm:$0xff]
        %v1434 = vld [vmem:[%s1397 + $0x120] sm:$0x3]
        %v1435 = vld [vmem:[%s1397 + $0x128] sm:$0x3]
        %v1436 = vld [vmem:[%s1397 + $0x130] sm:$0x3]
        %v1437 = vld [vmem:[%s1397 + $0x138] sm:$0x3]
        %v1439 = vsel %vm380, %v1394, 0
        %v1442 = vsel %vm380, %v1395, 0
        %v1445 = vsel %vm380, %v1396, 0
        %v1448 = vsel %vm390, %v1434, 0
        %v1451 = vsel %vm390, %v1435, 0
        %v1454 = vsel %vm390, %v1436, 0
        %v1457 = vsel %vm390, %v1437, 0
        %1459 = vmatprep.subr.mxu0 %v1399
        %1460 = vmatpush1.msra.mxu0 %v1398
        %1461 = vmatprep.subr.mxu0 %v1403
        %1462 = vmatpush1.msra.mxu0 %v1402
        %1463 = vmatprep.subr.mxu0 %v1407
        %1464 = vmatpush1.msra.mxu0 %v1406
        %1465 = vmatprep.subr.mxu0 %v1411
        %1466 = vmatpush1.msra.mxu0 %v1410
        %1467 = vmatprep.subr.mxu0 %v1415
        %1468 = vmatpush1.msra.mxu0 %v1414
        %1469 = vmatprep.subr.mxu0 %v1419
        %1470 = vmatpush1.msra.mxu0 %v1418
        %1471 = vmatprep.subr.mxu0 %v1423
        %1472 = vmatpush1.msra.mxu0 %v1422
        %1473 = vmatprep.subr.mxu0 %v1427
        %1474 = vmatpush1.msra.mxu0 %v1426
        %1475 = vmatprep.subr.mxu0 %v1431
        %1476 = vmatpush1.msra.mxu0 %v1430
        %1477 = vmatprep.subr.mxu0 %v1451
        %1478 = vmatpush1.msra.mxu0 %v1448
        %1479 = vmatprep.subr.mxu0 0.0
        %1480 = vmatpush1.msra.mxu0 0.0
        %1481 = vmatprep.subr.mxu0 0.0
        %1482 = vmatpush1.msra.mxu0 0.0
        %1483 = vmatprep.subr.mxu0 0.0
        %1484 = vmatpush1.msra.mxu0 0.0
        %1485 = vmatprep.subr.mxu0 0.0
        %1486 = vmatpush1.msra.mxu0 0.0
        %1487 = vmatprep.subr.mxu0 0.0
        %1488 = vmatpush1.msra.mxu0 0.0
        %1489 = vmatprep.subr.mxu0 0.0
        %1490 = vmatpush1.msra.mxu0 0.0
        %1491 = vmatprep.subr.mxu0 0.0
        %1492 = vmatpush1.msra.mxu0 0.0
        %1493 = vmatprep.subr.mxu0 0.0
        %1494 = vmatpush1.msra.mxu0 0.0
        %1495 = vmatprep.subr.mxu0 0.0
        %1496 = vmatpush1.msra.mxu0 0.0
        %1497 = vmatprep.subr.mxu0 0.0
        %1498 = vmatpush1.msra.mxu0 0.0
        %1499 = vmatprep.subr.mxu0 0.0
        %1500 = vmatpush1.msra.mxu0 0.0
        %1501 = vmatprep.subr.mxu0 0.0
        %1502 = vmatpush1.msra.mxu0 0.0
        %1503 = vmatprep.subr.mxu0 0.0
        %1504 = vmatpush1.msra.mxu0 0.0
        %1505 = vmatprep.subr.mxu0 0.0
        %1506 = vmatpush1.msra.mxu0 0.0
        %1507 = vmatprep.subr.mxu0 0.0
        %1508 = vmatpush1.msra.mxu0 0.0
        %1509 = vmatprep.subr.mxu0 0.0
        %1510 = vmatpush1.msra.mxu0 0.0
        %1511 = vmatprep.subr.mxu0 0.0
        %1512 = vmatpush1.msra.mxu0 0.0
        %1513 = vmatprep.subr.mxu0 0.0
        %1514 = vmatpush1.msra.mxu0 0.0
        %1515 = vmatprep.subr.mxu0 0.0
        %1516 = vmatpush1.msra.mxu0 0.0
        %1517 = vmatprep.subr.mxu0 0.0
        %1518 = vmatpush1.msra.mxu0 0.0
        %1519 = vmatprep.subr.mxu0 0.0
        %1520 = vmatpush1.msra.mxu0 0.0
        %1521 = vmatprep.subr.mxu0 0.0
        %1522 = vmatpush1.msra.mxu0 0.0
        %1523 = vmatprep.mubr.f32.mxu0 0.0
        %1524 = vmatmul.mubr.f32.gmra.mrb[0].mxu0 %v1439
        %v1525 = vpop.f32.mrb[0].mxu0
        %v1526 = vadd.f32 0.0, %v1525
        %v1527 = vpop.f32.mrb[0].mxu0
        %v1528 = vadd.f32 0.0, %v1527
        %1529 = vmatprep.mubr.f32.mxu0 0.0
        %1530 = vmatmul.mubr.f32.gmra.mrb[0].mxu0 %v1442
        %v1531 = vpop.f32.mrb[0].mxu0
        %v1532 = vadd.f32 0.0, %v1531
        %v1533 = vpop.f32.mrb[0].mxu0
        %v1534 = vadd.f32 0.0, %v1533
        %1535 = vmatprep.mubr.f32.mxu0 0.0
        %1536 = vmatmul.mubr.f32.gmra.mrb[0].mxu0 %v1445
        %v1537 = vpop.f32.mrb[0].mxu0
        %v1538 = vadd.f32 0.0, %v1537
        %v1539 = vpop.f32.mrb[0].mxu0
        %v1540 = vadd.f32 0.0, %v1539
        %1541 = vdwg.mxu0
        %1542 = vmatprep.subr.mxu0 %v1401
        %1543 = vmatpush1.msra.mxu0 %v1400
        %1544 = vmatprep.subr.mxu0 %v1405
        %1545 = vmatpush1.msra.mxu0 %v1404
        %1546 = vmatprep.subr.mxu0 %v1409
        %1547 = vmatpush1.msra.mxu0 %v1408
        %1548 = vmatprep.subr.mxu0 %v1413
        %1549 = vmatpush1.msra.mxu0 %v1412
        %1550 = vmatprep.subr.mxu0 %v1417
        %1551 = vmatpush1.msra.mxu0 %v1416
        %1552 = vmatprep.subr.mxu0 %v1421
        %1553 = vmatpush1.msra.mxu0 %v1420
        %1554 = vmatprep.subr.mxu0 %v1425
        %1555 = vmatpush1.msra.mxu0 %v1424
        %1556 = vmatprep.subr.mxu0 %v1429
        %1557 = vmatpush1.msra.mxu0 %v1428
        %1558 = vmatprep.subr.mxu0 %v1433
        %1559 = vmatpush1.msra.mxu0 %v1432
        %1560 = vmatprep.subr.mxu0 %v1457
        %1561 = vmatpush1.msra.mxu0 %v1454
        %1562 = vmatprep.subr.mxu0 0.0
        %1563 = vmatpush1.msra.mxu0 0.0
        %1564 = vmatprep.subr.mxu0 0.0
        %1565 = vmatpush1.msra.mxu0 0.0
        %1566 = vmatprep.subr.mxu0 0.0
        %1567 = vmatpush1.msra.mxu0 0.0
        %1568 = vmatprep.subr.mxu0 0.0
        %1569 = vmatpush1.msra.mxu0 0.0
        %1570 = vmatprep.subr.mxu0 0.0
        %1571 = vmatpush1.msra.mxu0 0.0
        %1572 = vmatprep.subr.mxu0 0.0
        %1573 = vmatpush1.msra.mxu0 0.0
        %1574 = vmatprep.subr.mxu0 0.0
        %1575 = vmatpush1.msra.mxu0 0.0
        %1576 = vmatprep.subr.mxu0 0.0
        %1577 = vmatpush1.msra.mxu0 0.0
        %1578 = vmatprep.subr.mxu0 0.0
        %1579 = vmatpush1.msra.mxu0 0.0
        %1580 = vmatprep.subr.mxu0 0.0
        %1581 = vmatpush1.msra.mxu0 0.0
        %1582 = vmatprep.subr.mxu0 0.0
        %1583 = vmatpush1.msra.mxu0 0.0
        %1584 = vmatprep.subr.mxu0 0.0
        %1585 = vmatpush1.msra.mxu0 0.0
        %1586 = vmatprep.subr.mxu0 0.0
        %1587 = vmatpush1.msra.mxu0 0.0
        %1588 = vmatprep.subr.mxu0 0.0
        %1589 = vmatpush1.msra.mxu0 0.0
        %1590 = vmatprep.subr.mxu0 0.0
        %1591 = vmatpush1.msra.mxu0 0.0
        %1592 = vmatprep.subr.mxu0 0.0
        %1593 = vmatpush1.msra.mxu0 0.0
        %1594 = vmatprep.subr.mxu0 0.0
        %1595 = vmatpush1.msra.mxu0 0.0
        %1596 = vmatprep.subr.mxu0 0.0
        %1597 = vmatpush1.msra.mxu0 0.0
        %1598 = vmatprep.subr.mxu0 0.0
        %1599 = vmatpush1.msra.mxu0 0.0
        %1600 = vmatprep.subr.mxu0 0.0
        %1601 = vmatpush1.msra.mxu0 0.0
        %1602 = vmatprep.subr.mxu0 0.0
        %1603 = vmatpush1.msra.mxu0 0.0
        %1604 = vmatprep.subr.mxu0 0.0
        %1605 = vmatpush1.msra.mxu0 0.0
        %1606 = vmatprep.mubr.f32.mxu0 0.0
        %1607 = vmatmul.mubr.f32.gmra.mrb[0].mxu0 %v1439
        %v1608 = vpop.f32.mrb[0].mxu0
        %v1609 = vadd.f32 0.0, %v1608
        %v1610 = vpop.f32.mrb[0].mxu0
        %v1611 = vadd.f32 0.0, %v1610
        %1612 = vmatprep.mubr.f32.mxu0 0.0
        %1613 = vmatmul.mubr.f32.gmra.mrb[0].mxu0 %v1442
        %v1614 = vpop.f32.mrb[0].mxu0
        %v1615 = vadd.f32 0.0, %v1614
        %v1616 = vpop.f32.mrb[0].mxu0
        %v1617 = vadd.f32 0.0, %v1616
        %1618 = vmatprep.mubr.f32.mxu0 0.0
        %1619 = vmatmul.mubr.f32.gmra.mrb[0].mxu0 %v1445
        %v1620 = vpop.f32.mrb[0].mxu0
        %v1621 = vadd.f32 0.0, %v1620
        %v1622 = vpop.f32.mrb[0].mxu0
        %v1623 = vadd.f32 0.0, %v1622
        %1624 = vdwg.mxu0
        %v1625 = vadd.f32 %v1382, %v1526
        %v1626 = vadd.f32 %v1383, %v1528
        %v1627 = vadd.f32 %v1384, %v1609
        %v1628 = vadd.f32 %v1385, %v1611
        %v1629 = vadd.f32 %v1386, %v1532
        %v1630 = vadd.f32 %v1387, %v1534
        %v1631 = vadd.f32 %v1388, %v1615
        %v1632 = vadd.f32 %v1389, %v1617
        %v1633 = vadd.f32 %v1390, %v1538
        %v1634 = vadd.f32 %v1391, %v1540
        %v1635 = vadd.f32 %v1392, %v1621
        %v1636 = vadd.f32 %v1393, %v1623
        %1637 = vst [vmem:[#allocation2] sm:$0xff] %v1625
        %1638 = vst [vmem:[#allocation2 + $0x8] sm:$0xff] %v1626
        %1639 = vst [vmem:[#allocation2 + $0x10] sm:$0xff] %v1627
        %1640 = vst [vmem:[#allocation2 + $0x18] sm:$0xff] %v1628
        %1641 = vst [vmem:[#allocation2 + $0x20] sm:$0xff] %v1629
        %1642 = vst [vmem:[#allocation2 + $0x28] sm:$0xff] %v1630
        %1643 = vst [vmem:[#allocation2 + $0x30] sm:$0xff] %v1631
        %1644 = vst [vmem:[#allocation2 + $0x38] sm:$0xff] %v1632
        %1645 = vst [vmem:[#allocation2 + $0x40] sm:$0xf] %v1633
        %1646 = vst [vmem:[#allocation2 + $0x48] sm:$0xf] %v1634
        %1647 = vst [vmem:[#allocation2 + $0x50] sm:$0xf] %v1635
        %1648 = vst [vmem:[#allocation2 + $0x58] sm:$0xf] %v1636
        %v1649 = vld [vmem:[#allocation2] sm:$0xff]
        %v1650 = vld [vmem:[#allocation2 + $0x8] sm:$0xff]
        %v1651 = vld [vmem:[#allocation2 + $0x10] sm:$0xff]
        %v1652 = vld [vmem:[#allocation2 + $0x18] sm:$0xff]
        %v1653 = vld [vmem:[#allocation2 + $0x20] sm:$0xff]
        %v1654 = vld [vmem:[#allocation2 + $0x28] sm:$0xff]
        %v1655 = vld [vmem:[#allocation2 + $0x30] sm:$0xff]
        %v1656 = vld [vmem:[#allocation2 + $0x38] sm:$0xff]
        %v1657 = vld [vmem:[#allocation2 + $0x40] sm:$0xff]
        %v1658 = vld [vmem:[#allocation2 + $0x48] sm:$0xff]
        %v1659 = vld [vmem:[#allocation2 + $0x50] sm:$0xff]
        %v1660 = vld [vmem:[#allocation2 + $0x58] sm:$0xff]
        %v1661 = vld [vmem:[%s2] sm:$0xf]
        %v1663 = vlaneseq
        %v1664 = vshrl.u32 %v1663, 7
        %v1665 = vsub.s32 0, %v1664
        %v1666 = vrot.slane %v1661, %v1665
        %v1667 = vlaneseq
        %v1668 = vshrl.u32 %v1667, 7
        %v1669 = vsub.s32 1, %v1668
        %v1670 = vrot.slane %v1661, %v1669
        %v1671 = vlaneseq
        %v1672 = vshrl.u32 %v1671, 7
        %v1673 = vsub.s32 2, %v1672
        %v1674 = vrot.slane %v1661, %v1673
        %v1675 = vlaneseq
        %v1676 = vshrl.u32 %v1675, 7
        %v1677 = vsub.s32 3, %v1676
        %v1678 = vrot.slane %v1661, %v1677
        %v1683 = vmul.f32 %v1649, %v1666
        %v1684 = vmul.f32 %v1650, %v1670
        %v1685 = vmul.f32 %v1651, %v1674
        %v1686 = vmul.f32 %v1652, %v1678
        %v1687 = vmul.f32 %v1653, %v1666
        %v1688 = vmul.f32 %v1654, %v1670
        %v1689 = vmul.f32 %v1655, %v1674
        %v1690 = vmul.f32 %v1656, %v1678
        %v1691 = vmul.f32 %v1657, %v1666
        %v1692 = vmul.f32 %v1658, %v1670
        %v1693 = vmul.f32 %v1659, %v1674
        %v1694 = vmul.f32 %v1660, %v1678
        %v1695 = vld [vmem:[%s3] sm:$0xf]
        %v1697 = vlaneseq
        %v1698 = vshrl.u32 %v1697, 7
        %v1699 = vsub.s32 0, %v1698
        %v1700 = vrot.slane %v1695, %v1699
        %v1701 = vlaneseq
        %v1702 = vshrl.u32 %v1701, 7
        %v1703 = vsub.s32 1, %v1702
        %v1704 = vrot.slane %v1695, %v1703
        %v1705 = vlaneseq
        %v1706 = vshrl.u32 %v1705, 7
        %v1707 = vsub.s32 2, %v1706
        %v1708 = vrot.slane %v1695, %v1707
        %v1709 = vlaneseq
        %v1710 = vshrl.u32 %v1709, 7
        %v1711 = vsub.s32 3, %v1710
        %v1712 = vrot.slane %v1695, %v1711
        %v1717 = vadd.f32 %v1683, %v1700
        %v1718 = vadd.f32 %v1684, %v1704
        %v1719 = vadd.f32 %v1685, %v1708
        %v1720 = vadd.f32 %v1686, %v1712
        %v1721 = vadd.f32 %v1687, %v1700
        %v1722 = vadd.f32 %v1688, %v1704
        %v1723 = vadd.f32 %v1689, %v1708
        %v1724 = vadd.f32 %v1690, %v1712
        %v1725 = vadd.f32 %v1691, %v1700
        %v1726 = vadd.f32 %v1692, %v1704
        %v1727 = vadd.f32 %v1693, %v1708
        %v1728 = vadd.f32 %v1694, %v1712
        %v1729 = vtanh.pop %v1717
        %v1730 = vtanh.pop %v1718
        %v1731 = vtanh.pop %v1721
        %v1732 = vtanh.pop %v1722
        %v1733 = vtanh.pop %v1725
        %v1734 = vtanh.pop %v1726
        %v1735 = vsub.f32 0.0, %v1719
        %v1736 = vsub.f32 0.0, %v1720
        %v1737 = vsub.f32 0.0, %v1723
        %v1738 = vsub.f32 0.0, %v1724
        %v1739 = vsub.f32 0.0, %v1727
        %v1740 = vsub.f32 0.0, %v1728
        %v1741 = vmul.f32 %v1735, 1.442695
        %v1742 = vpow.pop %v1741
        %v1743 = vmul.f32 %v1736, 1.442695
        %v1744 = vpow.pop %v1743
        %v1745 = vmul.f32 %v1737, 1.442695
        %v1746 = vpow.pop %v1745
        %v1747 = vmul.f32 %v1738, 1.442695
        %v1748 = vpow.pop %v1747
        %v1749 = vmul.f32 %v1739, 1.442695
        %v1750 = vpow.pop %v1749
        %v1751 = vmul.f32 %v1740, 1.442695
        %v1752 = vpow.pop %v1751
        %v1753 = vadd.f32 %v1742, 1.0
        %v1754 = vadd.f32 %v1744, 1.0
        %v1755 = vadd.f32 %v1746, 1.0
        %v1756 = vadd.f32 %v1748, 1.0
        %v1757 = vadd.f32 %v1750, 1.0
        %v1758 = vadd.f32 %v1752, 1.0
        %v1759 = vrcp.pop %v1753
        %v1760 = vmul.f32 1.0, %v1759
        %v1761 = vrcp.pop %v1754
        %v1762 = vmul.f32 1.0, %v1761
        %v1763 = vrcp.pop %v1755
        %v1764 = vmul.f32 1.0, %v1763
        %v1765 = vrcp.pop %v1756
        %v1766 = vmul.f32 1.0, %v1765
        %v1767 = vrcp.pop %v1757
        %v1768 = vmul.f32 1.0, %v1767
        %v1769 = vrcp.pop %v1758
        %v1770 = vmul.f32 1.0, %v1769
        %v1771 = vmul.f32 %v1729, %v1760
        %v1772 = vmul.f32 %v1730, %v1762
        %v1773 = vmul.f32 %v1731, %v1764
        %v1774 = vmul.f32 %v1732, %v1766
        %v1775 = vmul.f32 %v1733, %v1768
        %v1776 = vmul.f32 %v1734, %v1770
        %v1777 = vlaneseq
        %v1778 = vshrl.u32 %v1777, 7
        %v1779 = vadd.s32 %v1778, 8
        %v1780 = vadd.s32 %v1778, 16
        %vm1781 = vcmp.lt.s32.totalorder %v1778, 0
        %v1782 = vsub.s32 0, %v1778
        %v1783 = vsel %vm1781, %v1782, %v1778
        %v1784 = vmul.u32.u64.compose %v1783, 2863311531
        %v1785 = vextract.low.u32 %v1784
        %v1786 = vextract.high.u32 %v1784
        %v1787 = vshrl.u32 %v1786, 4
        %v1788 = vmul.u32 %v1787, 24
        %v1789 = vsub.s32 %v1783, %v1788
        %v1790 = vsub.s32 0, %v1789
        %v1791 = vsel %vm1781, %v1790, %v1789
        %vm1792 = vcmp.lt.s32.totalorder %v1779, 0
        %v1793 = vsub.s32 0, %v1779
        %v1794 = vsel %vm1792, %v1793, %v1779
        %v1795 = vmul.u32.u64.compose %v1794, 2863311531
        %v1796 = vextract.low.u32 %v1795
        %v1797 = vextract.high.u32 %v1795
        %v1798 = vshrl.u32 %v1797, 4
        %v1799 = vmul.u32 %v1798, 24
        %v1800 = vsub.s32 %v1794, %v1799
        %v1801 = vsub.s32 0, %v1800
        %v1802 = vsel %vm1792, %v1801, %v1800
        %vm1803 = vcmp.lt.s32.totalorder %v1780, 0
        %v1804 = vsub.s32 0, %v1780
        %v1805 = vsel %vm1803, %v1804, %v1780
        %v1806 = vmul.u32.u64.compose %v1805, 2863311531
        %v1807 = vextract.low.u32 %v1806
        %v1808 = vextract.high.u32 %v1806
        %v1809 = vshrl.u32 %v1808, 4
        %v1810 = vmul.u32 %v1809, 24
        %v1811 = vsub.s32 %v1805, %v1810
        %v1812 = vsub.s32 0, %v1811
        %v1813 = vsel %vm1803, %v1812, %v1811
        %vm1814 = vcmp.ne.s32.totalorder %v1791, 0
        %vm1815 = vcmp.ne.s32.totalorder %v1802, 0
        %vm1816 = vcmp.ne.s32.totalorder %v1813, 0
        %vm1817 = vcmp.lt.s32.totalorder %v1791, 0
        %vm1818 = vcmp.lt.s32.totalorder %v1802, 0
        %vm1819 = vcmp.lt.s32.totalorder %v1813, 0
        %vm1820 = vmand %vm1817, %vm1814
        %vm1821 = vmand %vm1818, %vm1815
        %vm1822 = vmand %vm1819, %vm1816
        %v1823 = vadd.s32 %v1791, 24
        %v1824 = vadd.s32 %v1802, 24
        %v1825 = vadd.s32 %v1813, 24
        %v1826 = vsel %vm1820, %v1823, %v1791
        %v1827 = vsel %vm1821, %v1824, %v1802
        %v1828 = vsel %vm1822, %v1825, %v1813
        %vm1829 = vcmp.lt.s32.totalorder %v1826, 16
        %vm1830 = vcmp.lt.s32.totalorder %v1827, 16
        %vm1831 = vcmp.lt.s32.totalorder %v1828, 16
        %v1832 = vsel %vm1829, 1, 0
        %v1833 = vsel %vm1830, 1, 0
        %v1834 = vsel %vm1831, 1, 0
        %vm1835 = vcmp.eq.s32.totalorder %v1832, 1
        %vm1836 = vcmp.eq.s32.totalorder %v1833, 1
        %vm1837 = vcmp.eq.s32.totalorder %v1834, 1
        %v1838 = vsel %vm1835, %v1771, 0.0
        %v1839 = vsel %vm1835, %v1772, 0.0
        %v1840 = vsel %vm1836, %v1773, 0.0
        %v1841 = vsel %vm1836, %v1774, 0.0
        %v1842 = vsel %vm1837, %v1775, 0.0
        %v1843 = vsel %vm1837, %v1776, 0.0
        %v1844 = vadd.f32 %v1838, %v1840
        %v1845 = vadd.f32 %v1844, %v1842
        %v1846 = vrot.slane %v1845, 4
        %v1847 = vadd.f32 %v1845, %v1846
        %v1848 = vrot.slane %v1847, 2
        %v1849 = vadd.f32 %v1847, %v1848
        %v1850 = vrot.slane %v1849, 1
        %v1851 = vadd.f32 %v1849, %v1850
        %v1852 = vadd.f32 %v1839, %v1841
        %v1853 = vadd.f32 %v1852, %v1843
        %v1854 = vrot.slane %v1853, 4
        %v1855 = vadd.f32 %v1853, %v1854
        %v1856 = vrot.slane %v1855, 2
        %v1857 = vadd.f32 %v1855, %v1856
        %v1858 = vrot.slane %v1857, 1
        %v1859 = vadd.f32 %v1857, %v1858
        %v1862 = vcombine.low %v1851, %v1859
        %v1864 = vunpack.c.l.s4 1966171168
        %v1865 = vunpack.c.0.s8 %v1864
        %v1866 = vlaneseq
        %v1867 = vshrl.u32 %v1866, 7
        %v1868 = vsub.s32 %v1865, %v1867
        %v1869 = vrot.slane %v1862, %v1868
        %v1871 = vunpack.c.l.s4 1966171168
        %v1872 = vunpack.c.0.s8 %v1871
        %v1873 = vlaneseq
        %v1874 = vshrl.u32 %v1873, 7
        %v1875 = vsub.s32 %v1872, %v1874
        %v1876 = vrot.slane %v1869, %v1875
        %v1878 = vlaneseq
        %vm1879 = vcmp.ge.s32.totalorder %v1878, 0
        %vm1880 = vcmp.lt.s32.totalorder %v1878, 256
        %vm1881 = vmand %vm1879, %vm1880
        %1882 = vst.msk [vmem:[%s333] sm:$0x3] %vm1881, %v1876
        %v1883 = vld [vmem:[%s295] sm:$0xff]
        %v1884 = vld [vmem:[%s295 + $0x8] sm:$0xff]
        %v1885 = vld [vmem:[%s295 + $0x10] sm:$0xff]
        %v1886 = vld [vmem:[%s295 + $0x18] sm:$0xff]
        %v1887 = vld [vmem:[%s295 + $0x20] sm:$0xff]
        %v1888 = vld [vmem:[%s295 + $0x28] sm:$0xff]
        %v1889 = vmul.f32 %v1838, %v1883
        %v1890 = vmul.f32 %v1839, %v1884
        %v1891 = vmul.f32 %v1840, %v1885
        %v1892 = vmul.f32 %v1841, %v1886
        %v1893 = vmul.f32 %v1842, %v1887
        %v1894 = vmul.f32 %v1843, %v1888
        %v1895 = vadd.f32 %v1889, %v1838
        %v1896 = vadd.f32 %v1890, %v1839
        %v1897 = vadd.f32 %v1891, %v1840
        %v1898 = vadd.f32 %v1892, %v1841
        %v1899 = vadd.f32 %v1893, %v1842
        %v1900 = vadd.f32 %v1894, %v1843
        %1901 = vst [vmem:[%s326] sm:$0xff] 0.0
        %1902 = vst [vmem:[%s326 + $0x8] sm:$0xff] 0.0
        %1903 = vst [vmem:[%s326 + $0x10] sm:$0xff] 0.0
        %1904 = vst [vmem:[%s326 + $0x18] sm:$0xff] 0.0
        %1905 = vst [vmem:[%s326 + $0x20] sm:$0xff] 0.0
        %1906 = vst [vmem:[%s326 + $0x28] sm:$0xff] 0.0
        %v1913 = vrot.slane %v1895, 6
        %v1914 = vrot.slane %v1896, 6
        %v1915 = vrot.slane %v1897, 6
        %v1916 = vsel %vm390, %v1913, %v1915
        %v1917 = vrot.slane %v1898, 6
        %v1918 = vsel %vm390, %v1914, %v1917
        %v1919 = vrot.slane %v1899, 6
        %v1920 = vsel %vm390, %v1915, %v1919
        %v1921 = vrot.slane %v1900, 6
        %v1922 = vsel %vm390, %v1917, %v1921
        %1929 = vst [vmem:[%s326] sm:$0xfc] %v1913
        %1930 = vst [vmem:[%s326 + $0x8] sm:$0xfc] %v1914
        %1931 = vst [vmem:[%s326 + $0x10] sm:$0xff] %v1916
        %1932 = vst [vmem:[%s326 + $0x18] sm:$0xff] %v1918
        %1933 = vst [vmem:[%s326 + $0x20] sm:$0xff] %v1920
        %1934 = vst [vmem:[%s326 + $0x28] sm:$0xff] %v1922
        %s1935 = sand.u32 %s151, 1
        %s1936 = scalar_lea.sflag [#allocation5], %s1935
        %s1937 = sand.u32 %s151, 1
        %s1938 = smul.addr %s1937, 48
        %s1939 = scalar_lea.vmem [#allocation9], %s1938
        %s1940 = sand.u32 %s177, 1
        %s1941 = scalar_lea.sflag [#allocation11], %s1940
        %s1942 = sand.u32 %s177, 1
        %s1943 = smul.addr %s1942, 2
        %s1944 = scalar_lea.vmem [#allocation10], %s1943
        // Predicated region
        $region53: #{tpu_custom_call.1} parent=39 // pred_check
          %p1945 = pneg %p161
        $region54: #{tpu_custom_call.1} parent=39 // pred_check_branch
          %1947 = sbr.rel (%p1945) target = $region56
        $region55: #{tpu_custom_call.1} parent=39 // pred_region
          %s1948 = smul.u32 3, %s28
          %s1950 = ssub.s32 768, 768
          %1951 = vsyncadd %s1936, %s1950
          %s1952 = smul.addr %s1948, 2
          %s1953 = smul.addr %s1952, 128
          %s1954 = scalar_lea.hbm %s5, %s1953
          %s1955 = sshll.u32 %s1939, 4
          %s1956 = int_to_ptr.vmem [resolvable:$true] %s1955
          %1961 = dma.vmem_to_hbm [thread:$0]  %s1956, 768, %s1954, %s1936, 256, 256, 16
        $region56: #{tpu_custom_call.1} parent=39 // pred_fallthru
          _
        // Predicated region
        $region57: #{tpu_custom_call.1} parent=39 // pred_check
          %p1962 = pneg %p187
        $region58: #{tpu_custom_call.1} parent=39 // pred_check_branch
          %1964 = sbr.rel (%p1962) target = $region60
        $region59: #{tpu_custom_call.1} parent=39 // pred_region
          %s1966 = ssub.s32 32, 32
          %1967 = vsyncadd %s1941, %s1966
          %s1968 = smul.addr %s28, 2
          %s1969 = smul.addr %s1968, 16
          %s1970 = scalar_lea.hbm %s6, %s1969
          %s1972 = sshll.u32 %s1944, 4
          %s1973 = int_to_ptr.vmem [resolvable:$true] %s1972
          %1975 = dma.vmem_to_hbm [thread:$0]  %s1973, 32, %s1970, %s1941
        $region60: #{tpu_custom_call.1} parent=39 // pred_fallthru
          _
      $region40: #{tpu_custom_call.1} parent=5 // pred_fallthru
        _
      %p1976 = scmp.le.s32.totalorder 2, %s23
      // Predicated region
      $region61: #{tpu_custom_call.1} parent=5 // pred_check
        %p1977 = pneg %p1976
      $region62: #{tpu_custom_call.1} parent=5 // pred_check_branch
        %1979 = sbr.rel (%p1977) target = $region64
      $region63: #{tpu_custom_call.1} parent=5 // pred_region
        %s1980 = ssub.s32 %s23, 2
        // Predicated region
        $region65: #{tpu_custom_call.1} parent=63 // pred_check
          %p1981 = pneg %p167
        $region66: #{tpu_custom_call.1} parent=63 // pred_check_branch
          %1983 = sbr.rel (%p1981) target = $region68
        $region67: #{tpu_custom_call.1} parent=63 // pred_region
          %s1984 = sand.u32 %s152, 1
          %s1985 = scalar_lea.sflag [#allocation5], %s1984
          %s1986 = sand.u32 %s152, 1
          %s1987 = smul.addr %s1986, 48
          %s1988 = scalar_lea.vmem [#allocation9], %s1987
          %1989 = dma.done %s1985, 768
        $region68: #{tpu_custom_call.1} parent=63 // pred_fallthru
          _
        // Predicated region
        $region69: #{tpu_custom_call.1} parent=63 // pred_check
          %p1990 = pneg %p193
        $region70: #{tpu_custom_call.1} parent=63 // pred_check_branch
          %1992 = sbr.rel (%p1990) target = $region72
        $region71: #{tpu_custom_call.1} parent=63 // pred_region
          %s1993 = sand.u32 %s178, 1
          %s1994 = scalar_lea.sflag [#allocation11], %s1993
          %s1995 = sand.u32 %s178, 1
          %s1996 = smul.addr %s1995, 2
          %s1997 = scalar_lea.vmem [#allocation10], %s1996
          %1998 = dma.done %s1994, 32
        $region72: #{tpu_custom_call.1} parent=63 // pred_fallthru
          _
      $region64: #{tpu_custom_call.1} parent=5 // pred_fallthru
        _
    $region6: #{tpu_custom_call.1} parent=1 // loop_footer
      %s27 = sadd.s32 1, %s23
    $region7: #{tpu_custom_call.1} parent=1 // loop_footer_branch
      %22 = sbr.rel target = $region3
    $region8: #{tpu_custom_call.1} parent=1 // loop_exit
      _
    %1999 = vsyncpa [#allocation4], 1
    %s2000 = scalar_lea.sflag [#allocation4], 1
    %2001 = vsyncpa %s2000, 1
    %2002 = vsyncpa [#allocation7], 1
    %2003 = vsyncpa [#allocation5], 1
    %s2004 = scalar_lea.sflag [#allocation5], 1
    %2005 = vsyncpa %s2004, 1
    %2006 = vsyncpa [#allocation11], 1
    %s2007 = scalar_lea.sflag [#allocation11], 1
    %2008 = vsyncpa %s2007, 1

</llo_original>
